<compile_context>
chip_gen: v7x
topology: tpu7x:2x2x1
jax: 0.10.0
libtpu: 0.0.40
codegen_flags: <defaults>
</compile_context>

<pallas_src>
import jax
import jax.numpy as jnp
from jax import lax
from jax.experimental import pallas as pl
from jax.experimental.pallas import tpu as pltpu


# ------------------------------- helpers ------------------------------------

_LANE = 128


def _round_up(n, m):
    return ((n + m - 1) // m) * m


def _pick_tile(n, want):
    """Largest multiple of 128 that divides n and is <= want.

    n must already be a multiple of 128 (we pad).  Multiples of 128 satisfy the
    (8/16/32, 128) layout rule for every dtype, so one quantum covers
    f32 / bf16 / int8 blocks.
    """
    want = max(_LANE, (want // _LANE) * _LANE)
    t = min(n, want)
    while t > _LANE and n % t:
        t -= _LANE
    return t


def _pad2d(x, rows, cols):
    pr, pc = rows - x.shape[0], cols - x.shape[1]
    if pr == 0 and pc == 0:
        return x
    return jnp.pad(x, ((0, pr), (0, pc)))


# ----------------------------- Pallas kernels -------------------------------

def _score_epilogue(acc, b1_ref, w2_ref, g_ref, out_ref):
    """ReLU -> per-node score -> add Gumbel. All f32."""
    h = jnp.maximum(acc + b1_ref[...], 0.0)                     # (tm, hidden)
    # (1, hidden) x (tm, hidden) -> (1, tm): the score lands lane-dense
    # directly; no cross-lane reduce + (tm,)->(1,tm) relayout on the epilogue.
    score = lax.dot_general(w2_ref[...], h, (((1,), (1,)), ((), ())),
                            preferred_element_type=jnp.float32)
    out_ref[...] = score + g_ref[...]


def _gnn_score_fused_kernel(a_ref, x_ref, w1_ref, b1_ref, w2_ref, g_ref,
                            out_ref, ax_ref):
    """hidden >= f: accumulate A@X over k tiles, then (.)@W1 + epilogue."""
    k = pl.program_id(1)

    @pl.when(k == 0)
    def _():
        ax_ref[...] = jnp.zeros_like(ax_ref)

    # (tm, tk) @ (tk, f): bf16 MXU operands, f32 accumulation. A is 0/1 so the
    # bf16 carry is exact; only X sees bf16 rounding.
    ax_ref[...] += jnp.dot(a_ref[...].astype(jnp.bfloat16), x_ref[...],
                           preferred_element_type=jnp.float32)

    @pl.when(k == pl.num_programs(1) - 1)
    def _():
        # Tiny (tm, f) @ (f, hidden) second matmul kept in f32.
        h_pre = jnp.dot(ax_ref[...], w1_ref[...],
                        preferred_element_type=jnp.float32)
        _score_epilogue(h_pre, b1_ref, w2_ref, g_ref, out_ref)


def _gnn_score_premixed_kernel(a_ref, xw_ref, b1_ref, w2_ref, g_ref,
                               out_ref, acc_ref):
    """f > hidden: features premixed with W1 outside; accumulate A@(XW1)."""
    k = pl.program_id(1)

    @pl.when(k == 0)
    def _():
        acc_ref[...] = jnp.zeros_like(acc_ref)

    acc_ref[...] += jnp.dot(a_ref[...].astype(jnp.bfloat16), xw_ref[...],
                            preferred_element_type=jnp.float32)

    @pl.when(k == pl.num_programs(1) - 1)
    def _():
        _score_epilogue(acc_ref[...], b1_ref, w2_ref, g_ref, out_ref)


def _mask_adjacency_kernel(a_ref, mrow_ref, mcol_ref, out_ref):
    # A_aug[i, j] = A[i, j] * mask[i] * mask[j]   (pure VPU, HBM-bound)
    out_ref[...] = a_ref[...] * mrow_ref[...] * mcol_ref[...]


# ------------------------------ wrappers -------------------------------------

def gnn_perturbed_scores_pallas(A, X, W1, b1, W2, gumbel, *,
                                row_tile=256, k_tile=512):
    """relu((A @ X) @ W1 + b1) @ W2 + gumbel  ->  (n,) perturbed scores.

    The contraction over n is k-tiled so VMEM is O(tm*tk), independent of n.
    A is read in its stored dtype (carry it bf16: exact for 0/1 adjacencies and
    halves the dominant n^2 HBM read).
    """
    n, f = X.shape
    hidden = W1.shape[1]

    # Pad n to a multiple of 128 so tiles are always legal. Padded rows give
    # garbage scores that are sliced off; padded A columns are zero so the
    # k-reduction is unaffected.
    n_pad = _round_up(n, _LANE)
    tm = _pick_tile(n_pad, row_tile)
    tk = _pick_tile(n_pad, k_tile)
    grid = (n_pad // tm, n_pad // tk)

    A_p = _pad2d(A, n_pad, n_pad)
    X_p = _pad2d(X.astype(jnp.float32), n_pad, f)
    g_row = _pad2d(jnp.asarray(gumbel, jnp.float32).reshape(1, n), 1, n_pad)
    b1_row = jnp.asarray(b1, jnp.float32).reshape(1, hidden)
    w2_row = jnp.asarray(W2, jnp.float32).reshape(1, hidden)

    def resident(shape):
        # Grid-invariant operand: same block every step -> stays in VMEM.
        return pl.BlockSpec(shape, lambda i, k: (0,) * len(shape))

    a_spec = pl.BlockSpec((tm, tk), lambda i, k: (i, k))
    g_spec = pl.BlockSpec((1, tm), lambda i, k: (0, i))
    out_spec = pl.BlockSpec((1, tm), lambda i, k: (0, i))

    if hidden >= f:
        # Keep (A @ X) @ W1 in-kernel: the n^2-scaled operand has f (< hidden) cols.
        kernel = _gnn_score_fused_kernel
        feats = (X_p.astype(jnp.bfloat16), W1.astype(jnp.float32))
        feat_specs = [pl.BlockSpec((tk, f), lambda i, k: (k, 0)),
                      resident((f, hidden))]
        acc = pltpu.VMEM((tm, f), jnp.float32)
        k_inner = f
    else:
        # f > hidden: A @ (X @ W1); the grid-invariant X @ W1 is computed once.
        kernel = _gnn_score_premixed_kernel
        xw = jnp.dot(X_p, W1.astype(jnp.float32))
        feats = (xw.astype(jnp.bfloat16),)
        feat_specs = [pl.BlockSpec((tk, hidden), lambda i, k: (k, 0))]
        acc = pltpu.VMEM((tm, hidden), jnp.float32)
        k_inner = hidden

    operands = feats + (b1_row, w2_row, g_row)
    in_specs = [a_spec] + feat_specs + [resident(b1_row.shape),
                                        resident(w2_row.shape), g_spec]

    cost = pl.CostEstimate(
        flops=2 * n_pad * n_pad * k_inner + 2 * n_pad * f * hidden,
        transcendentals=0,
        bytes_accessed=int(A_p.size * A_p.dtype.itemsize
                           + grid[0] * sum(x.size * x.dtype.itemsize
                                           for x in operands)
                           + n_pad * 4),
    )

    out = pl.pallas_call(
        kernel,
        out_shape=jax.ShapeDtypeStruct((1, n_pad), jnp.float32),
        grid_spec=pltpu.PrefetchScalarGridSpec(
            num_scalar_prefetch=0,
            grid=grid,
            in_specs=in_specs,
            out_specs=out_spec,
            scratch_shapes=[acc],
        ),
        compiler_params=pltpu.CompilerParams(
            # Row tiles shard across TensorCores; k is the reduction axis.
            dimension_semantics=("parallel", "arbitrary"),
        ),
        cost_estimate=cost,
    )(A_p, *operands)
    return out.reshape(n_pad)[:n]


def mask_adjacency_pallas(A, mask, *, row_tile=512, col_tile=512):
    """A_aug[i, j] = A[i, j] * mask[i] * mask[j].

    Pure HBM-bound copy-with-multiply; 512 tiles sit near the measured HBM
    roofline and the working set (~3 MiB in bf16) fits every scoped-VMEM
    default (raise to 1024 on v6e if desired).
    """
    n = A.shape[0]
    n_pad = _round_up(n, _LANE)
    tm = _pick_tile(n_pad, row_tile)
    tn = _pick_tile(n_pad, col_tile)
    grid = (n_pad // tm, n_pad // tn)

    A_p = _pad2d(A, n_pad, n_pad)
    m = mask.astype(A.dtype)
    if n_pad != n:
        m = jnp.pad(m, (0, n_pad - n))
    mrow = m.reshape(1, n_pad)
    mcol = m.reshape(n_pad, 1)

    out = pl.pallas_call(
        _mask_adjacency_kernel,
        out_shape=jax.ShapeDtypeStruct((n_pad, n_pad), A.dtype),
        grid=grid,
        in_specs=[
            pl.BlockSpec((tm, tn), lambda i, j: (i, j)),
            pl.BlockSpec((1, tn), lambda i, j: (0, j)),
            # (tm, 1) column block is lane-padded but only re-fetched when the
            # row tile changes; negligible next to the n^2 stream.
            pl.BlockSpec((tm, 1), lambda i, j: (i, 0)),
        ],
        out_specs=pl.BlockSpec((tm, tn), lambda i, j: (i, j)),
        compiler_params=pltpu.CompilerParams(
            dimension_semantics=("parallel", "parallel"),
        ),
    )(A_p, mrow, mcol)
    return out[:n, :n]


# ------------------------------ forward pass ---------------------------------

def node_sampling_head_forward(A, X, params, k_ratio, key):
    """Mirrors NodeSamplingHead.forward(A, X) -> A_aug.

    gnn(A, X) -> H_v = relu((A @ X) @ W1 + b1);  mlp(H_v) = H_v @ W2 + b2.
    """
    W1, b1, W2, b2 = params
    n = A.shape[0]
    num_keep = max(1, int(k_ratio * n))

    # Gumbel noise via the standard JAX RNG (portable: works on real TPUs and
    # under interpret mode); the Pallas epilogue adds it to the scores.
    u = jax.random.uniform(key, (n,), dtype=jnp.float32)
    gumbel = -jnp.log(-jnp.log(u + 1e-8) + 1e-8)

    perturbed = gnn_perturbed_scores_pallas(A, X, W1, b1, W2, gumbel)
    perturbed = perturbed + jnp.reshape(jnp.asarray(b2, jnp.float32), ())  # shift; top-k invariant

    # TODO(synk): top-k selection + boolean scatter stay in plain JAX/XLA; a
    # sorting network inside Pallas is not worth it for a length-n vector.
    _, topk_idx = jax.lax.top_k(perturbed, num_keep)
    node_mask = jnp.zeros((n,), dtype=bool).at[topk_idx].set(True)
    return mask_adjacency_pallas(A, node_mask)


# --------------------------------- driver ------------------------------------

if __name__ == "__main__":
    n, f, hidden = 512, 64, 128      # exercises grid=(2,1) GNN and the mask pass
    k_ratio = 0.5

    key = jax.random.PRNGKey(0)
    k_a, k_x, k_w1, k_w2, k_gumbel = jax.random.split(key, 5)

    # A carried as bf16 end-to-end: a 0/1 adjacency is exact in bf16 and it
    # halves the n^2 HBM traffic of both kernels.
    A_rand = jax.random.uniform(k_a, (n, n))
    A = (A_rand + A_rand.T > 1.0).astype(jnp.bfloat16)
    A = jnp.maximum(A, jnp.eye(n, dtype=jnp.bfloat16))   # self loops
    X = jax.random.normal(k_x, (n, f), dtype=jnp.float32)

    # Deterministic parameters for the synthetic gnn / mlp.
    W1 = 0.1 * jax.random.normal(k_w1, (f, hidden), dtype=jnp.float32)
    b1 = jnp.zeros((1, hidden), dtype=jnp.float32)
    W2 = 0.1 * jax.random.normal(k_w2, (hidden, 1), dtype=jnp.float32)
    b2 = jnp.zeros((1, 1), dtype=jnp.float32)

    A_aug = node_sampling_head_forward(A, X, (W1, b1, W2, b2), k_ratio, k_gumbel)
    A_aug = jax.block_until_ready(A_aug)

    # Structural correctness check (independent of the RNG draw): A has self
    # loops, so the kept-node mask is recoverable from diag(A_aug).
    num_keep = max(1, int(k_ratio * n))
    mask_rec = jnp.diag(A_aug) > 0
    mf = mask_rec.astype(A.dtype)
    ref = A * mf[None, :] * mf[:, None]
    assert A_aug.shape == (n, n)
    assert A_aug.dtype == A.dtype
    assert int(mask_rec.sum()) == num_keep
    assert bool(jnp.all(A_aug == ref))
    print("KERNEL_OK")
</pallas_src>

<mosaic_0001>
module attributes {stable_mosaic.version = 11 : i64} {
  func.func @_gnn_score_fused_kernel(%arg0: i32, %arg1: i32, %arg2: memref<256x512xbf16, #tpu.memory_space<vmem>>, %arg3: memref<512x64xbf16, #tpu.memory_space<vmem>>, %arg4: memref<64x128xf32, #tpu.memory_space<vmem>>, %arg5: memref<1x128xf32, #tpu.memory_space<vmem>>, %arg6: memref<1x128xf32, #tpu.memory_space<vmem>>, %arg7: memref<1x256xf32, #tpu.memory_space<vmem>>, %arg8: memref<1x256xf32, #tpu.memory_space<vmem>>, %arg9: memref<256x64xf32, #tpu.memory_space<vmem>>) attributes {dimension_semantics = [#tpu.dimension_semantics<parallel>, #tpu.dimension_semantics<arbitrary>], iteration_bounds = array<i64: 2, 1>, scalar_prefetch = 0 : i64, scratch_operands = 1 : i64, tpu.core_type = #tpu.core_type<tc>, window_params = [{transform_indices = @transform_0, window_bounds = array<i64: 256, 512>}, {transform_indices = @transform_1, window_bounds = array<i64: 512, 64>}, {pipeline_mode = #tpu.pipeline_mode<synchronous>, transform_indices = @transform_2, window_bounds = array<i64: 64, 128>}, {pipeline_mode = #tpu.pipeline_mode<synchronous>, transform_indices = @transform_3, window_bounds = array<i64: 1, 128>}, {pipeline_mode = #tpu.pipeline_mode<synchronous>, transform_indices = @transform_4, window_bounds = array<i64: 1, 128>}, {transform_indices = @transform_5, window_bounds = array<i64: 1, 256>}, {transform_indices = @transform_6, window_bounds = array<i64: 1, 256>}]} {
    %c0_i32 = arith.constant 0 : i32
    %0 = arith.cmpi eq, %arg1, %c0_i32 : i32
    %1 = arith.extui %0 : i1 to i32
    %c0_i32_0 = arith.constant 0 : i32
    %2 = arith.cmpi ne, %1, %c0_i32_0 : i32
    scf.if %2 {
      %cst_10 = arith.constant 0.000000e+00 : f32
      %12 = vector.broadcast %cst_10 : f32 to vector<256x64xf32>
      %c0_11 = arith.constant 0 : index
      %c0_12 = arith.constant 0 : index
      %13 = vector.load %arg9[%c0_11, %c0_12] : memref<256x64xf32, #tpu.memory_space<vmem>>, vector<256x64xf32>
      tpu.vector_store %arg9[%c0_11, %c0_12], %12 {strides = array<i32>} : memref<256x64xf32, #tpu.memory_space<vmem>>, vector<256x64xf32>,
    } else {
    }
    %c0 = arith.constant 0 : index
    %c0_1 = arith.constant 0 : index
    %3 = vector.load %arg9[%c0, %c0_1] : memref<256x64xf32, #tpu.memory_space<vmem>>, vector<256x64xf32>
    %c0_2 = arith.constant 0 : index
    %c0_3 = arith.constant 0 : index
    %4 = vector.load %arg2[%c0_2, %c0_3] : memref<256x512xbf16, #tpu.memory_space<vmem>>, vector<256x512xbf16>
    %c0_4 = arith.constant 0 : index
    %c0_5 = arith.constant 0 : index
    %5 = vector.load %arg3[%c0_4, %c0_5] : memref<512x64xbf16, #tpu.memory_space<vmem>>, vector<512x64xbf16>
    %cst = arith.constant dense<0.000000e+00> : vector<256x64xf32>
    %6 = tpu.matmul %4, %5, %cst {dimension_numbers = #tpu.dot_dimension_numbers<[1], [0], [0], [1], [0, 0, 1, 1], [], []>} : vector<256x512xbf16>, vector<512x64xbf16>, vector<256x64xf32> -> vector<256x64xf32>
    %7 = arith.addf %3, %6 : vector<256x64xf32>
    %c0_6 = arith.constant 0 : index
    %c0_7 = arith.constant 0 : index
    %8 = vector.load %arg9[%c0_6, %c0_7] : memref<256x64xf32, #tpu.memory_space<vmem>>, vector<256x64xf32>
    tpu.vector_store %arg9[%c0_6, %c0_7], %7 {strides = array<i32>} : memref<256x64xf32, #tpu.memory_space<vmem>>, vector<256x64xf32>,
    %c0_i32_8 = arith.constant 0 : i32
    %9 = arith.cmpi eq, %arg1, %c0_i32_8 : i32
    %10 = arith.extui %9 : i1 to i32
    %c0_i32_9 = arith.constant 0 : i32
    %11 = arith.cmpi ne, %10, %c0_i32_9 : i32
    scf.if %11 {
      %c0_10 = arith.constant 0 : index
      %c0_11 = arith.constant 0 : index
      %12 = vector.load %arg9[%c0_10, %c0_11] : memref<256x64xf32, #tpu.memory_space<vmem>>, vector<256x64xf32>
      %c0_12 = arith.constant 0 : index
      %c0_13 = arith.constant 0 : index
      %13 = vector.load %arg4[%c0_12, %c0_13] : memref<64x128xf32, #tpu.memory_space<vmem>>, vector<64x128xf32>
      %cst_14 = arith.constant dense<0.000000e+00> : vector<256x128xf32>
      %14 = tpu.matmul %12, %13, %cst_14 {dimension_numbers = #tpu.dot_dimension_numbers<[1], [0], [0], [1], [0, 0, 1, 1], [], []>} : vector<256x64xf32>, vector<64x128xf32>, vector<256x128xf32> -> vector<256x128xf32>
      %c0_15 = arith.constant 0 : index
      %c0_16 = arith.constant 0 : index
      %15 = vector.load %arg5[%c0_15, %c0_16] : memref<1x128xf32, #tpu.memory_space<vmem>>, vector<1x128xf32>
      %16 = vector.broadcast %15 : vector<1x128xf32> to vector<256x128xf32>
      %17 = arith.addf %14, %16 : vector<256x128xf32>
      %cst_17 = arith.constant 0.000000e+00 : f32
      %18 = vector.broadcast %cst_17 : f32 to vector<256x128xf32>
      %19 = arith.maximumf %17, %18 : vector<256x128xf32>
      %c0_18 = arith.constant 0 : index
      %c0_19 = arith.constant 0 : index
      %20 = vector.load %arg6[%c0_18, %c0_19] : memref<1x128xf32, #tpu.memory_space<vmem>>, vector<1x128xf32>
      %cst_20 = arith.constant dense<0.000000e+00> : vector<1x256xf32>
      %21 = tpu.matmul %20, %19, %cst_20 {dimension_numbers = #tpu.dot_dimension_numbers<[1], [1], [0], [0], [0, 0, 1, 0], [], []>} : vector<1x128xf32>, vector<256x128xf32>, vector<1x256xf32> -> vector<1x256xf32>
      %c0_21 = arith.constant 0 : index
      %c0_22 = arith.constant 0 : index
      %22 = vector.load %arg7[%c0_21, %c0_22] : memref<1x256xf32, #tpu.memory_space<vmem>>, vector<1x256xf32>
      %23 = arith.addf %21, %22 : vector<1x256xf32>
      %c0_23 = arith.constant 0 : index
      %c0_24 = arith.constant 0 : index
      %24 = vector.load %arg8[%c0_23, %c0_24] : memref<1x256xf32, #tpu.memory_space<vmem>>, vector<1x256xf32>
      tpu.vector_store %arg8[%c0_23, %c0_24], %23 {strides = array<i32>} : memref<1x256xf32, #tpu.memory_space<vmem>>, vector<1x256xf32>,
    } else {
    }
    return
  }
  func.func @transform_0(%arg0: i32, %arg1: i32) -> (i32, i32) {
    %c0_i32 = arith.constant 0 : i32
    return %arg0, %arg1 : i32, i32
  }
  func.func @transform_1(%arg0: i32, %arg1: i32) -> (i32, i32) {
    %c0_i32 = arith.constant 0 : i32
    %c0_i32_0 = arith.constant 0 : i32
    return %arg1, %c0_i32 : i32, i32
  }
  func.func @transform_2(%arg0: i32, %arg1: i32) -> (i32, i32) {
    %c0_i32 = arith.constant 0 : i32
    %c0_i32_0 = arith.constant 0 : i32
    %c0_i32_1 = arith.constant 0 : i32
    return %c0_i32, %c0_i32_0 : i32, i32
  }
  func.func @transform_3(%arg0: i32, %arg1: i32) -> (i32, i32) {
    %c0_i32 = arith.constant 0 : i32
    %c0_i32_0 = arith.constant 0 : i32
    %c0_i32_1 = arith.constant 0 : i32
    return %c0_i32, %c0_i32_0 : i32, i32
  }
  func.func @transform_4(%arg0: i32, %arg1: i32) -> (i32, i32) {
    %c0_i32 = arith.constant 0 : i32
    %c0_i32_0 = arith.constant 0 : i32
    %c0_i32_1 = arith.constant 0 : i32
    return %c0_i32, %c0_i32_0 : i32, i32
  }
  func.func @transform_5(%arg0: i32, %arg1: i32) -> (i32, i32) {
    %c0_i32 = arith.constant 0 : i32
    %c0_i32_0 = arith.constant 0 : i32
    return %c0_i32, %arg0 : i32, i32
  }
  func.func @transform_6(%arg0: i32, %arg1: i32) -> (i32, i32) {
    %c0_i32 = arith.constant 0 : i32
    %c0_i32_0 = arith.constant 0 : i32
    return %c0_i32, %arg0 : i32, i32
  }
}

</mosaic_0001>

<llo_original>
// kernel: tpu_custom_call.1
$region0: #{tpu_custom_call.1}
  #allocation0 [shape = 'u32[]', space=smem, size = 0x4, offset = 0x4, fixed_abs, tag = 'smem constant byte address 0x4 - core index']
  #allocation1 [shape = 'u32[144,128]{1,0:T(1,128)}', space=vmem, size = 0x12000, scoped, tag = 'internal scratch']
  #allocation2 [shape = 'f32[256,64]{1,0:T(8,128)}', space=vmem, size = 0x20000, scoped, tag = 'scratch operand']
  %s0 = inlined_call_operand.hbm [shape: bf16[512,512], index: 0, kind: input, shape index: {}]
  %s1 = inlined_call_operand.vmem [shape: bf16[512,64], index: 1, kind: input, shape index: {}]
  %s2 = inlined_call_operand.vmem [shape: f32[64,128], index: 2, kind: input, shape index: {}]
  %s3 = inlined_call_operand.vmem [shape: f32[1,128], index: 3, kind: input, shape index: {}]
  %s4 = inlined_call_operand.vmem [shape: f32[1,128], index: 4, kind: input, shape index: {}]
  %s5 = inlined_call_operand.vmem [shape: f32[1,512], index: 5, kind: input, shape index: {}]
  %s6 = inlined_call_operand.hbm [shape: f32[1,512], index: 6, kind: output, shape index: {}]
  %s7 = sld [smem:[#allocation0]]
  $region69: #{tpu_custom_call.1} parent=0
    _
  %s9 = ssub.s32 1, %s7
  %s10 = scalar_select 0, %s9, %s7
  $region1: #{tpu_custom_call.1} parent=0
    #allocation3 [shape = 'u8[524288]{0}', space=vmem, size = 0x80000, scoped, tag = 'input window, operand 0']
    #allocation4 [shape = 's32[2]{0}', space=sflag, size = 0x8, scoped, tag = 'scoped memory for tpu_custom_call.1']
    #allocation5 [shape = 's32[2]{0}', space=sflag, size = 0x8, scoped, tag = 'scoped memory for tpu_custom_call.1']
    #allocation6 [shape = 'u8[2048]{0}', space=vmem, size = 0x800, scoped, tag = 'output window, operand 0']
    %11 = vsyncpa [#allocation4], 0
    %s12 = scalar_lea.sflag [#allocation4], 1
    %13 = vsyncpa %s12, 0
    %14 = vsyncpa [#allocation5], 0
    %s15 = scalar_lea.sflag [#allocation5], 1
    %16 = vsyncpa %s15, 0
    loop: start=0, step=1, limit=4
    $region2: #{tpu_custom_call.1} parent=1 // loop_pre_header
      _
    $region3: #{tpu_custom_call.1} parent=1 // loop_header
      %s18 = sphi 0, %s22
      %p19 = scmp.ge.s32.totalorder %s18, 4
      %s25 = sphi 0, %s37
      %s26 = sphi 0, %s33
      %s27 = sphi 0, %s25
      %s28 = sphi 0, %s26
      %s29 = sphi 0, %s27
      %s30 = sphi 0, %s28
      %s42 = sphi 0, %s44
      %s45 = sphi 0, %s42
      %s46 = sphi 0, %s45
      %s62 = sphi 0, %s46
      %s68 = sphi 0, %s70
      %s71 = sphi 0, %s68
      %s72 = sphi 0, %s71
      %s88 = sphi 0, %s72
      %s92 = sphi 0, %s92
      %s94 = sphi 0, %s92
      %s95 = sphi 0, %s94
      %s109 = sphi 0, %s95
      %s113 = sphi 0, %s113
      %s115 = sphi 0, %s113
      %s116 = sphi 0, %s115
      %s130 = sphi 0, %s116
      %s134 = sphi 0, %s134
      %s136 = sphi 0, %s134
      %s137 = sphi 0, %s136
      %s151 = sphi 0, %s137
      %s157 = sphi 0, %s159
      %s160 = sphi 0, %s157
      %s161 = sphi 0, %s160
      %s177 = sphi 0, %s161
      %s183 = sphi 0, %s185
      %s186 = sphi 0, %s183
      %s187 = sphi 0, %s186
      %s203 = sphi 0, %s187
    $region4: #{tpu_custom_call.1} parent=1 // loop_header_branch
      %21 = sbr.rel (%p19) target = $region8
    $region5: #{tpu_custom_call.1} parent=1 // loop_body
      %s23 = ssub.s32 %s18, 1
      %s24 = ssub.s32 %s18, 2
      %s31 = sadd.s32 1, %s26
      %p32 = scmp.ge.s32.totalorder %s31, 1
      %s33 = scalar_select %p32, 0, %s31
      %s34 = sadd.s32 1, %s25
      %s35 = scalar_select %p32, %s34, %s25
      %p36 = scmp.ge.s32.totalorder %s35, 2
      %s37 = scalar_select %p36, 0, %s35
      %s38 = ssub.s32 %s25, %s37
      %s39 = ssub.s32 %s26, %s33
      %s40 = sor.u32 %s38, %s39
      %p41 = scmp.eq.s32.totalorder %s40, 0
      %s43 = sadd.s32 %s42, 1
      %s44 = scalar_select %p41, %s42, %s43
      %p47 = pneg %p41
      %p48 = scmp.eq.s32.totalorder %s18, 1
      %p49 = por %p47, %p48
      %p50 = scmp.ne.s32.totalorder %s42, %s45
      %p51 = scmp.eq.s32.totalorder %s18, 0
      %p52 = por %p50, %p51
      %p53 = scmp.ne.s32.totalorder %s42, %s45
      %p54 = scmp.eq.s32.totalorder %s23, 1
      %p55 = por %p53, %p54
      %p56 = scmp.ne.s32.totalorder %s45, %s46
      %p57 = scmp.eq.s32.totalorder %s23, 0
      %p58 = por %p56, %p57
      %p59 = scmp.ne.s32.totalorder %s45, %s46
      %p60 = scmp.eq.s32.totalorder %s24, 1
      %p61 = por %p59, %p60
      %p63 = scmp.ne.s32.totalorder %s46, %s62
      %p64 = scmp.eq.s32.totalorder %s24, 0
      %p65 = por %p63, %p64
      %s66 = ssub.s32 %s26, %s33
      %p67 = scmp.eq.s32.totalorder %s66, 0
      %s69 = sadd.s32 %s68, 1
      %s70 = scalar_select %p67, %s68, %s69
      %p73 = pneg %p67
      %p74 = scmp.eq.s32.totalorder %s18, 1
      %p75 = por %p73, %p74
      %p76 = scmp.ne.s32.totalorder %s68, %s71
      %p77 = scmp.eq.s32.totalorder %s18, 0
      %p78 = por %p76, %p77
      %p79 = scmp.ne.s32.totalorder %s68, %s71
      %p80 = scmp.eq.s32.totalorder %s23, 1
      %p81 = por %p79, %p80
      %p82 = scmp.ne.s32.totalorder %s71, %s72
      %p83 = scmp.eq.s32.totalorder %s23, 0
      %p84 = por %p82, %p83
      %p85 = scmp.ne.s32.totalorder %s71, %s72
      %p86 = scmp.eq.s32.totalorder %s24, 1
      %p87 = por %p85, %p86
      %p89 = scmp.ne.s32.totalorder %s72, %s88
      %p90 = scmp.eq.s32.totalorder %s24, 0
      %p91 = por %p89, %p90
      %s93 = sadd.s32 %s92, 1
      %p96 = scmp.eq.s32.totalorder %s18, 1
      %p97 = scmp.ne.s32.totalorder %s92, %s94
      %p98 = scmp.eq.s32.totalorder %s18, 0
      %p99 = por %p97, %p98
      %p100 = scmp.ne.s32.totalorder %s92, %s94
      %p101 = scmp.eq.s32.totalorder %s23, 1
      %p102 = por %p100, %p101
      %p103 = scmp.ne.s32.totalorder %s94, %s95
      %p104 = scmp.eq.s32.totalorder %s23, 0
      %p105 = por %p103, %p104
      %p106 = scmp.ne.s32.totalorder %s94, %s95
      %p107 = scmp.eq.s32.totalorder %s24, 1
      %p108 = por %p106, %p107
      %p110 = scmp.ne.s32.totalorder %s95, %s109
      %p111 = scmp.eq.s32.totalorder %s24, 0
      %p112 = por %p110, %p111
      %s114 = sadd.s32 %s113, 1
      %p117 = scmp.eq.s32.totalorder %s18, 1
      %p118 = scmp.ne.s32.totalorder %s113, %s115
      %p119 = scmp.eq.s32.totalorder %s18, 0
      %p120 = por %p118, %p119
      %p121 = scmp.ne.s32.totalorder %s113, %s115
      %p122 = scmp.eq.s32.totalorder %s23, 1
      %p123 = por %p121, %p122
      %p124 = scmp.ne.s32.totalorder %s115, %s116
      %p125 = scmp.eq.s32.totalorder %s23, 0
      %p126 = por %p124, %p125
      %p127 = scmp.ne.s32.totalorder %s115, %s116
      %p128 = scmp.eq.s32.totalorder %s24, 1
      %p129 = por %p127, %p128
      %p131 = scmp.ne.s32.totalorder %s116, %s130
      %p132 = scmp.eq.s32.totalorder %s24, 0
      %p133 = por %p131, %p132
      %s135 = sadd.s32 %s134, 1
      %p138 = scmp.eq.s32.totalorder %s18, 1
      %p139 = scmp.ne.s32.totalorder %s134, %s136
      %p140 = scmp.eq.s32.totalorder %s18, 0
      %p141 = por %p139, %p140
      %p142 = scmp.ne.s32.totalorder %s134, %s136
      %p143 = scmp.eq.s32.totalorder %s23, 1
      %p144 = por %p142, %p143
      %p145 = scmp.ne.s32.totalorder %s136, %s137
      %p146 = scmp.eq.s32.totalorder %s23, 0
      %p147 = por %p145, %p146
      %p148 = scmp.ne.s32.totalorder %s136, %s137
      %p149 = scmp.eq.s32.totalorder %s24, 1
      %p150 = por %p148, %p149
      %p152 = scmp.ne.s32.totalorder %s137, %s151
      %p153 = scmp.eq.s32.totalorder %s24, 0
      %p154 = por %p152, %p153
      %s155 = ssub.s32 %s25, %s37
      %p156 = scmp.eq.s32.totalorder %s155, 0
      %s158 = sadd.s32 %s157, 1
      %s159 = scalar_select %p156, %s157, %s158
      %p162 = pneg %p156
      %p163 = scmp.eq.s32.totalorder %s18, 1
      %p164 = por %p162, %p163
      %p165 = scmp.ne.s32.totalorder %s157, %s160
      %p166 = scmp.eq.s32.totalorder %s18, 0
      %p167 = por %p165, %p166
      %p168 = scmp.ne.s32.totalorder %s157, %s160
      %p169 = scmp.eq.s32.totalorder %s23, 1
      %p170 = por %p168, %p169
      %p171 = scmp.ne.s32.totalorder %s160, %s161
      %p172 = scmp.eq.s32.totalorder %s23, 0
      %p173 = por %p171, %p172
      %p174 = scmp.ne.s32.totalorder %s160, %s161
      %p175 = scmp.eq.s32.totalorder %s24, 1
      %p176 = por %p174, %p175
      %p178 = scmp.ne.s32.totalorder %s161, %s177
      %p179 = scmp.eq.s32.totalorder %s24, 0
      %p180 = por %p178, %p179
      %s181 = ssub.s32 %s25, %s37
      %p182 = scmp.eq.s32.totalorder %s181, 0
      %s184 = sadd.s32 %s183, 1
      %s185 = scalar_select %p182, %s183, %s184
      %p188 = pneg %p182
      %p189 = scmp.eq.s32.totalorder %s18, 1
      %p190 = por %p188, %p189
      %p191 = scmp.ne.s32.totalorder %s183, %s186
      %p192 = scmp.eq.s32.totalorder %s18, 0
      %p193 = por %p191, %p192
      %p194 = scmp.ne.s32.totalorder %s183, %s186
      %p195 = scmp.eq.s32.totalorder %s23, 1
      %p196 = por %p194, %p195
      %p197 = scmp.ne.s32.totalorder %s186, %s187
      %p198 = scmp.eq.s32.totalorder %s23, 0
      %p199 = por %p197, %p198
      %p200 = scmp.ne.s32.totalorder %s186, %s187
      %p201 = scmp.eq.s32.totalorder %s24, 1
      %p202 = por %p200, %p201
      %p204 = scmp.ne.s32.totalorder %s187, %s203
      %p205 = scmp.eq.s32.totalorder %s24, 0
      %p206 = por %p204, %p205
      %p207 = scmp.le.s32.totalorder 1, %s18
      %p208 = scmp.lt.s32.totalorder %s18, 3
      %p209 = pnand %p207, %p208
      %p210 = pneg %p209
      // Predicated region
      $region9: #{tpu_custom_call.1} parent=5 // pred_check
        _
      $region10: #{tpu_custom_call.1} parent=5 // pred_check_branch
        %212 = sbr.rel (%p209) target = $region12
      $region11: #{tpu_custom_call.1} parent=5 // pred_region
        %s213 = ssub.s32 %s18, 1
        // Predicated region
        $region13: #{tpu_custom_call.1} parent=11 // pred_check
          %p214 = pneg %p84
        $region14: #{tpu_custom_call.1} parent=11 // pred_check_branch
          %216 = sbr.rel (%p214) target = $region16
        $region15: #{tpu_custom_call.1} parent=11 // pred_region
          %s217 = smul.u32 64, %s28
          %p218 = scmp.lt.s32.totalorder %s217, 63
          %s219 = scalar_select %p218, %s217, 63
          %s220 = smul.addr %s219, 4
          %s221 = scalar_lea.vmem %s1, %s220
          %s222 = smul.u32 64, %s28
        $region16: #{tpu_custom_call.1} parent=11 // pred_fallthru
          _
        // Predicated region
        $region17: #{tpu_custom_call.1} parent=11 // pred_check
          %p223 = pneg %p105
        $region18: #{tpu_custom_call.1} parent=11 // pred_check_branch
          %225 = sbr.rel (%p223) target = $region20
        $region19: #{tpu_custom_call.1} parent=11 // pred_region
          _
        $region20: #{tpu_custom_call.1} parent=11 // pred_fallthru
          _
        // Predicated region
        $region21: #{tpu_custom_call.1} parent=11 // pred_check
          %p226 = pneg %p126
        $region22: #{tpu_custom_call.1} parent=11 // pred_check_branch
          %228 = sbr.rel (%p226) target = $region24
        $region23: #{tpu_custom_call.1} parent=11 // pred_region
          _
        $region24: #{tpu_custom_call.1} parent=11 // pred_fallthru
          _
        // Predicated region
        $region25: #{tpu_custom_call.1} parent=11 // pred_check
          %p229 = pneg %p147
        $region26: #{tpu_custom_call.1} parent=11 // pred_check_branch
          %231 = sbr.rel (%p229) target = $region28
        $region27: #{tpu_custom_call.1} parent=11 // pred_region
          _
        $region28: #{tpu_custom_call.1} parent=11 // pred_fallthru
          _
      $region12: #{tpu_custom_call.1} parent=5 // pred_fallthru
        _
      %p232 = scmp.lt.s32.totalorder %s18, 2
      // Predicated region
      $region29: #{tpu_custom_call.1} parent=5 // pred_check
        %p233 = pneg %p232
      $region30: #{tpu_custom_call.1} parent=5 // pred_check_branch
        %235 = sbr.rel (%p233) target = $region32
      $region31: #{tpu_custom_call.1} parent=5 // pred_region
        // Predicated region
        $region33: #{tpu_custom_call.1} parent=31 // pred_check
          %p236 = pneg %p52
        $region34: #{tpu_custom_call.1} parent=31 // pred_check_branch
          %238 = sbr.rel (%p236) target = $region36
        $region35: #{tpu_custom_call.1} parent=31 // pred_region
          %s239 = sand.u32 %s42, 1
          %s240 = scalar_lea.sflag [#allocation4], %s239
          %s241 = sand.u32 %s42, 1
          %s242 = smul.addr %s241, 512
          %s243 = scalar_lea.vmem [#allocation3], %s242
          %s244 = smul.u32 32, %s25
          %s245 = smul.u32 4, %s26
          %s247 = ssub.s32 8192, 8192
          %248 = vsyncadd %s240, %s247
          %s249 = smul.addr %s244, 4
          %s250 = sadd.s32 %s245, %s249
          %s251 = smul.addr %s250, 64
          %s252 = scalar_lea.hbm %s0, %s251
          %s253 = sshll.u32 %s243, 4
          %s254 = int_to_ptr.vmem [resolvable:$true] %s253
          %259 = dma.hbm_to_vmem [thread:$0]  %s252, 8192, %s254, %s240, 256, 256, 16
        $region36: #{tpu_custom_call.1} parent=31 // pred_fallthru
          _
        // Predicated region
        $region37: #{tpu_custom_call.1} parent=31 // pred_check
          %p260 = pneg %p167
        $region38: #{tpu_custom_call.1} parent=31 // pred_check_branch
          %262 = sbr.rel (%p260) target = $region40
        $region39: #{tpu_custom_call.1} parent=31 // pred_region
          %s263 = smul.u32 2, %s25
          %p264 = scmp.lt.s32.totalorder %s263, 3
          %s265 = scalar_select %p264, %s263, 3
          %s266 = scalar_lea.vmem %s5, %s265
          %s267 = smul.u32 2, %s25
        $region40: #{tpu_custom_call.1} parent=31 // pred_fallthru
          _
      $region32: #{tpu_custom_call.1} parent=5 // pred_fallthru
        _
      %p268 = scmp.le.s32.totalorder 1, %s18
      %p269 = scmp.lt.s32.totalorder %s18, 3
      %p270 = pnand %p268, %p269
      %p271 = pneg %p270
      // Predicated region
      $region41: #{tpu_custom_call.1} parent=5 // pred_check
        _
      $region42: #{tpu_custom_call.1} parent=5 // pred_check_branch
        %273 = sbr.rel (%p270) target = $region44
      $region43: #{tpu_custom_call.1} parent=5 // pred_region
        %s274 = ssub.s32 %s18, 1
        %s275 = sand.u32 %s45, 1
        %s276 = scalar_lea.sflag [#allocation4], %s275
        %s277 = sand.u32 %s45, 1
        %s278 = smul.addr %s277, 512
        %s279 = scalar_lea.vmem [#allocation3], %s278
        // Predicated region
        $region45: #{tpu_custom_call.1} parent=43 // pred_check
          %p280 = pneg %p58
        $region46: #{tpu_custom_call.1} parent=43 // pred_check_branch
          %282 = sbr.rel (%p280) target = $region48
        $region47: #{tpu_custom_call.1} parent=43 // pred_region
          %283 = dma.done %s276, 8192
        $region48: #{tpu_custom_call.1} parent=43 // pred_fallthru
          _
        %s284 = sand.u32 %s45, 1
        %s285 = scalar_lea.sflag [#allocation4], %s284
        %s286 = sand.u32 %s45, 1
        %s287 = smul.addr %s286, 512
        %s288 = scalar_lea.vmem [#allocation3], %s287
        %p289 = pneg %p58
        %p290 = pneg %p55
        %s291 = smul.u32 64, %s28
        %p292 = scmp.lt.s32.totalorder %s291, 63
        %s293 = scalar_select %p292, %s291, 63
        %s294 = smul.addr %s293, 4
        %s295 = scalar_lea.vmem %s1, %s294
        %p296 = pneg %p84
        %p297 = pneg %p81
        %p298 = pneg %p105
        %p299 = pneg %p102
        %p300 = pneg %p126
        %p301 = pneg %p123
        %p302 = pneg %p147
        %p303 = pneg %p144
        %s304 = smul.u32 2, %s27
        %p305 = scmp.lt.s32.totalorder %s304, 3
        %s306 = scalar_select %p305, %s304, 3
        %s307 = scalar_lea.vmem %s5, %s306
        %p308 = pneg %p173
        %p309 = pneg %p170
        %p310 = pneg %p199
        %p311 = pneg %p196
        %s312 = sand.u32 %s186, 1
        %s313 = scalar_lea.sflag [#allocation5], %s312
        %s314 = sand.u32 %s186, 1
        %s315 = smul.addr %s314, 2
        %s316 = scalar_lea.vmem [#allocation6], %s315
        %s317 = smul.u32 32, %s27
        %s318 = smul.u32 4, %s28
        %s319 = smul.u32 64, %s28
        %p320 = scmp.lt.s32.totalorder %s319, 63
        %s321 = scalar_select %p320, %s319, 63
        %s322 = smul.addr %s321, 4
        %s323 = scalar_lea.vmem %s1, %s322
        %s324 = smul.u32 64, %s28
        %s325 = smul.u32 2, %s27
        %p326 = scmp.lt.s32.totalorder %s325, 3
        %s327 = scalar_select %p326, %s325, 3
        %s328 = scalar_lea.vmem %s5, %s327
        %s329 = smul.u32 2, %s27
        %s330 = smul.u32 2, %s27
        %p332 = scmp.eq.s32.totalorder %s28, 0
        // Predicated region
        $region49: #{tpu_custom_call.1} parent=43 // pred_check
          %p333 = pneg %p332
        $region50: #{tpu_custom_call.1} parent=43 // pred_check_branch
          %335 = sbr.rel (%p333) target = $region52
        $region51: #{tpu_custom_call.1} parent=43 // pred_region
          %vm336 = vcmask 523264
          %337 = vst.msk [vmem:[#allocation2] sm:$0xff] %vm336, 0.0
          %338 = vst.msk [vmem:[#allocation2 + $0x8] sm:$0xff] %vm336, 0.0
          %339 = vst.msk [vmem:[#allocation2 + $0x10] sm:$0xff] %vm336, 0.0
          %340 = vst.msk [vmem:[#allocation2 + $0x18] sm:$0xff] %vm336, 0.0
          %341 = vst.msk [vmem:[#allocation2 + $0x20] sm:$0xff] %vm336, 0.0
          %342 = vst.msk [vmem:[#allocation2 + $0x28] sm:$0xff] %vm336, 0.0
          %343 = vst.msk [vmem:[#allocation2 + $0x30] sm:$0xff] %vm336, 0.0
          %344 = vst.msk [vmem:[#allocation2 + $0x38] sm:$0xff] %vm336, 0.0
          %345 = vst.msk [vmem:[#allocation2 + $0x40] sm:$0xff] %vm336, 0.0
          %346 = vst.msk [vmem:[#allocation2 + $0x48] sm:$0xff] %vm336, 0.0
          %347 = vst.msk [vmem:[#allocation2 + $0x50] sm:$0xff] %vm336, 0.0
          %348 = vst.msk [vmem:[#allocation2 + $0x58] sm:$0xff] %vm336, 0.0
          %349 = vst.msk [vmem:[#allocation2 + $0x60] sm:$0xff] %vm336, 0.0
          %350 = vst.msk [vmem:[#allocation2 + $0x68] sm:$0xff] %vm336, 0.0
          %351 = vst.msk [vmem:[#allocation2 + $0x70] sm:$0xff] %vm336, 0.0
          %352 = vst.msk [vmem:[#allocation2 + $0x78] sm:$0xff] %vm336, 0.0
          %353 = vst.msk [vmem:[#allocation2 + $0x80] sm:$0xff] %vm336, 0.0
          %354 = vst.msk [vmem:[#allocation2 + $0x88] sm:$0xff] %vm336, 0.0
          %355 = vst.msk [vmem:[#allocation2 + $0x90] sm:$0xff] %vm336, 0.0
          %356 = vst.msk [vmem:[#allocation2 + $0x98] sm:$0xff] %vm336, 0.0
          %357 = vst.msk [vmem:[#allocation2 + $0xa0] sm:$0xff] %vm336, 0.0
          %358 = vst.msk [vmem:[#allocation2 + $0xa8] sm:$0xff] %vm336, 0.0
          %359 = vst.msk [vmem:[#allocation2 + $0xb0] sm:$0xff] %vm336, 0.0
          %360 = vst.msk [vmem:[#allocation2 + $0xb8] sm:$0xff] %vm336, 0.0
          %361 = vst.msk [vmem:[#allocation2 + $0xc0] sm:$0xff] %vm336, 0.0
          %362 = vst.msk [vmem:[#allocation2 + $0xc8] sm:$0xff] %vm336, 0.0
          %363 = vst.msk [vmem:[#allocation2 + $0xd0] sm:$0xff] %vm336, 0.0
          %364 = vst.msk [vmem:[#allocation2 + $0xd8] sm:$0xff] %vm336, 0.0
          %365 = vst.msk [vmem:[#allocation2 + $0xe0] sm:$0xff] %vm336, 0.0
          %366 = vst.msk [vmem:[#allocation2 + $0xe8] sm:$0xff] %vm336, 0.0
          %367 = vst.msk [vmem:[#allocation2 + $0xf0] sm:$0xff] %vm336, 0.0
          %368 = vst.msk [vmem:[#allocation2 + $0xf8] sm:$0xff] %vm336, 0.0
        $region52: #{tpu_custom_call.1} parent=43 // pred_fallthru
          _
        %v369 = vld [vmem:[#allocation2] sm:$0xff]
        %v370 = vld [vmem:[#allocation2 + $0x8] sm:$0xff]
        %v371 = vld [vmem:[#allocation2 + $0x10] sm:$0xff]
        %v372 = vld [vmem:[#allocation2 + $0x18] sm:$0xff]
        %v373 = vld [vmem:[#allocation2 + $0x20] sm:$0xff]
        %v374 = vld [vmem:[#allocation2 + $0x28] sm:$0xff]
        %v375 = vld [vmem:[#allocation2 + $0x30] sm:$0xff]
        %v376 = vld [vmem:[#allocation2 + $0x38] sm:$0xff]
        %v377 = vld [vmem:[#allocation2 + $0x40] sm:$0xff]
        %v378 = vld [vmem:[#allocation2 + $0x48] sm:$0xff]
        %v379 = vld [vmem:[#allocation2 + $0x50] sm:$0xff]
        %v380 = vld [vmem:[#allocation2 + $0x58] sm:$0xff]
        %v381 = vld [vmem:[#allocation2 + $0x60] sm:$0xff]
        %v382 = vld [vmem:[#allocation2 + $0x68] sm:$0xff]
        %v383 = vld [vmem:[#allocation2 + $0x70] sm:$0xff]
        %v384 = vld [vmem:[#allocation2 + $0x78] sm:$0xff]
        %v385 = vld [vmem:[#allocation2 + $0x80] sm:$0xff]
        %v386 = vld [vmem:[#allocation2 + $0x88] sm:$0xff]
        %v387 = vld [vmem:[#allocation2 + $0x90] sm:$0xff]
        %v388 = vld [vmem:[#allocation2 + $0x98] sm:$0xff]
        %v389 = vld [vmem:[#allocation2 + $0xa0] sm:$0xff]
        %v390 = vld [vmem:[#allocation2 + $0xa8] sm:$0xff]
        %v391 = vld [vmem:[#allocation2 + $0xb0] sm:$0xff]
        %v392 = vld [vmem:[#allocation2 + $0xb8] sm:$0xff]
        %v393 = vld [vmem:[#allocation2 + $0xc0] sm:$0xff]
        %v394 = vld [vmem:[#allocation2 + $0xc8] sm:$0xff]
        %v395 = vld [vmem:[#allocation2 + $0xd0] sm:$0xff]
        %v396 = vld [vmem:[#allocation2 + $0xd8] sm:$0xff]
        %v397 = vld [vmem:[#allocation2 + $0xe0] sm:$0xff]
        %v398 = vld [vmem:[#allocation2 + $0xe8] sm:$0xff]
        %v399 = vld [vmem:[#allocation2 + $0xf0] sm:$0xff]
        %v400 = vld [vmem:[#allocation2 + $0xf8] sm:$0xff]
        %v401 = vld [vmem:[%s279] sm:$0xff]
        %v402 = vld [vmem:[%s279 + $0x8] sm:$0xff]
        %v403 = vld [vmem:[%s279 + $0x10] sm:$0xff]
        %v404 = vld [vmem:[%s279 + $0x18] sm:$0xff]
        %v405 = vld [vmem:[%s279 + $0x20] sm:$0xff]
        %v406 = vld [vmem:[%s279 + $0x28] sm:$0xff]
        %v407 = vld [vmem:[%s279 + $0x30] sm:$0xff]
        %v408 = vld [vmem:[%s279 + $0x38] sm:$0xff]
        %v409 = vld [vmem:[%s279 + $0x40] sm:$0xff]
        %v410 = vld [vmem:[%s279 + $0x48] sm:$0xff]
        %v411 = vld [vmem:[%s279 + $0x50] sm:$0xff]
        %v412 = vld [vmem:[%s279 + $0x58] sm:$0xff]
        %v413 = vld [vmem:[%s279 + $0x60] sm:$0xff]
        %v414 = vld [vmem:[%s279 + $0x68] sm:$0xff]
        %v415 = vld [vmem:[%s279 + $0x70] sm:$0xff]
        %v416 = vld [vmem:[%s279 + $0x78] sm:$0xff]
        %v417 = vld [vmem:[%s279 + $0x80] sm:$0xff]
        %v418 = vld [vmem:[%s279 + $0x88] sm:$0xff]
        %v419 = vld [vmem:[%s279 + $0x90] sm:$0xff]
        %v420 = vld [vmem:[%s279 + $0x98] sm:$0xff]
        %v421 = vld [vmem:[%s279 + $0xa0] sm:$0xff]
        %v422 = vld [vmem:[%s279 + $0xa8] sm:$0xff]
        %v423 = vld [vmem:[%s279 + $0xb0] sm:$0xff]
        %v424 = vld [vmem:[%s279 + $0xb8] sm:$0xff]
        %v425 = vld [vmem:[%s279 + $0xc0] sm:$0xff]
        %v426 = vld [vmem:[%s279 + $0xc8] sm:$0xff]
        %v427 = vld [vmem:[%s279 + $0xd0] sm:$0xff]
        %v428 = vld [vmem:[%s279 + $0xd8] sm:$0xff]
        %v429 = vld [vmem:[%s279 + $0xe0] sm:$0xff]
        %v430 = vld [vmem:[%s279 + $0xe8] sm:$0xff]
        %v431 = vld [vmem:[%s279 + $0xf0] sm:$0xff]
        %v432 = vld [vmem:[%s279 + $0xf8] sm:$0xff]
        %v433 = vld [vmem:[%s279 + $0x100] sm:$0xff]
        %v434 = vld [vmem:[%s279 + $0x108] sm:$0xff]
        %v435 = vld [vmem:[%s279 + $0x110] sm:$0xff]
        %v436 = vld [vmem:[%s279 + $0x118] sm:$0xff]
        %v437 = vld [vmem:[%s279 + $0x120] sm:$0xff]
        %v438 = vld [vmem:[%s279 + $0x128] sm:$0xff]
        %v439 = vld [vmem:[%s279 + $0x130] sm:$0xff]
        %v440 = vld [vmem:[%s279 + $0x138] sm:$0xff]
        %v441 = vld [vmem:[%s279 + $0x140] sm:$0xff]
        %v442 = vld [vmem:[%s279 + $0x148] sm:$0xff]
        %v443 = vld [vmem:[%s279 + $0x150] sm:$0xff]
        %v444 = vld [vmem:[%s279 + $0x158] sm:$0xff]
        %v445 = vld [vmem:[%s279 + $0x160] sm:$0xff]
        %v446 = vld [vmem:[%s279 + $0x168] sm:$0xff]
        %v447 = vld [vmem:[%s279 + $0x170] sm:$0xff]
        %v448 = vld [vmem:[%s279 + $0x178] sm:$0xff]
        %v449 = vld [vmem:[%s279 + $0x180] sm:$0xff]
        %v450 = vld [vmem:[%s279 + $0x188] sm:$0xff]
        %v451 = vld [vmem:[%s279 + $0x190] sm:$0xff]
        %v452 = vld [vmem:[%s279 + $0x198] sm:$0xff]
        %v453 = vld [vmem:[%s279 + $0x1a0] sm:$0xff]
        %v454 = vld [vmem:[%s279 + $0x1a8] sm:$0xff]
        %v455 = vld [vmem:[%s279 + $0x1b0] sm:$0xff]
        %v456 = vld [vmem:[%s279 + $0x1b8] sm:$0xff]
        %v457 = vld [vmem:[%s279 + $0x1c0] sm:$0xff]
        %v458 = vld [vmem:[%s279 + $0x1c8] sm:$0xff]
        %v459 = vld [vmem:[%s279 + $0x1d0] sm:$0xff]
        %v460 = vld [vmem:[%s279 + $0x1d8] sm:$0xff]
        %v461 = vld [vmem:[%s279 + $0x1e0] sm:$0xff]
        %v462 = vld [vmem:[%s279 + $0x1e8] sm:$0xff]
        %v463 = vld [vmem:[%s279 + $0x1f0] sm:$0xff]
        %v464 = vld [vmem:[%s279 + $0x1f8] sm:$0xff]
        %v465 = vld [vmem:[%s323] sm:$0xf]
        %v466 = vld [vmem:[%s323 + $0x4] sm:$0xf]
        %v467 = vld [vmem:[%s323 + $0x8] sm:$0xf]
        %v468 = vld [vmem:[%s323 + $0xc] sm:$0xf]
        %v469 = vld [vmem:[%s323 + $0x10] sm:$0xf]
        %v470 = vld [vmem:[%s323 + $0x14] sm:$0xf]
        %v471 = vld [vmem:[%s323 + $0x18] sm:$0xf]
        %v472 = vld [vmem:[%s323 + $0x1c] sm:$0xf]
        %v473 = vld [vmem:[%s323 + $0x20] sm:$0xf]
        %v474 = vld [vmem:[%s323 + $0x24] sm:$0xf]
        %v475 = vld [vmem:[%s323 + $0x28] sm:$0xf]
        %v476 = vld [vmem:[%s323 + $0x2c] sm:$0xf]
        %v477 = vld [vmem:[%s323 + $0x30] sm:$0xf]
        %v478 = vld [vmem:[%s323 + $0x34] sm:$0xf]
        %v479 = vld [vmem:[%s323 + $0x38] sm:$0xf]
        %v480 = vld [vmem:[%s323 + $0x3c] sm:$0xf]
        %v481 = vld [vmem:[%s323 + $0x40] sm:$0xf]
        %v482 = vld [vmem:[%s323 + $0x44] sm:$0xf]
        %v483 = vld [vmem:[%s323 + $0x48] sm:$0xf]
        %v484 = vld [vmem:[%s323 + $0x4c] sm:$0xf]
        %v485 = vld [vmem:[%s323 + $0x50] sm:$0xf]
        %v486 = vld [vmem:[%s323 + $0x54] sm:$0xf]
        %v487 = vld [vmem:[%s323 + $0x58] sm:$0xf]
        %v488 = vld [vmem:[%s323 + $0x5c] sm:$0xf]
        %v489 = vld [vmem:[%s323 + $0x60] sm:$0xf]
        %v490 = vld [vmem:[%s323 + $0x64] sm:$0xf]
        %v491 = vld [vmem:[%s323 + $0x68] sm:$0xf]
        %v492 = vld [vmem:[%s323 + $0x6c] sm:$0xf]
        %v493 = vld [vmem:[%s323 + $0x70] sm:$0xf]
        %v494 = vld [vmem:[%s323 + $0x74] sm:$0xf]
        %v495 = vld [vmem:[%s323 + $0x78] sm:$0xf]
        %v496 = vld [vmem:[%s323 + $0x7c] sm:$0xf]
        %v497 = vld [vmem:[%s323 + $0x80] sm:$0xf]
        %v498 = vld [vmem:[%s323 + $0x84] sm:$0xf]
        %v499 = vld [vmem:[%s323 + $0x88] sm:$0xf]
        %v500 = vld [vmem:[%s323 + $0x8c] sm:$0xf]
        %v501 = vld [vmem:[%s323 + $0x90] sm:$0xf]
        %v502 = vld [vmem:[%s323 + $0x94] sm:$0xf]
        %v503 = vld [vmem:[%s323 + $0x98] sm:$0xf]
        %v504 = vld [vmem:[%s323 + $0x9c] sm:$0xf]
        %v505 = vld [vmem:[%s323 + $0xa0] sm:$0xf]
        %v506 = vld [vmem:[%s323 + $0xa4] sm:$0xf]
        %v507 = vld [vmem:[%s323 + $0xa8] sm:$0xf]
        %v508 = vld [vmem:[%s323 + $0xac] sm:$0xf]
        %v509 = vld [vmem:[%s323 + $0xb0] sm:$0xf]
        %v510 = vld [vmem:[%s323 + $0xb4] sm:$0xf]
        %v511 = vld [vmem:[%s323 + $0xb8] sm:$0xf]
        %v512 = vld [vmem:[%s323 + $0xbc] sm:$0xf]
        %v513 = vld [vmem:[%s323 + $0xc0] sm:$0xf]
        %v514 = vld [vmem:[%s323 + $0xc4] sm:$0xf]
        %v515 = vld [vmem:[%s323 + $0xc8] sm:$0xf]
        %v516 = vld [vmem:[%s323 + $0xcc] sm:$0xf]
        %v517 = vld [vmem:[%s323 + $0xd0] sm:$0xf]
        %v518 = vld [vmem:[%s323 + $0xd4] sm:$0xf]
        %v519 = vld [vmem:[%s323 + $0xd8] sm:$0xf]
        %v520 = vld [vmem:[%s323 + $0xdc] sm:$0xf]
        %v521 = vld [vmem:[%s323 + $0xe0] sm:$0xf]
        %v522 = vld [vmem:[%s323 + $0xe4] sm:$0xf]
        %v523 = vld [vmem:[%s323 + $0xe8] sm:$0xf]
        %v524 = vld [vmem:[%s323 + $0xec] sm:$0xf]
        %v525 = vld [vmem:[%s323 + $0xf0] sm:$0xf]
        %v526 = vld [vmem:[%s323 + $0xf4] sm:$0xf]
        %v527 = vld [vmem:[%s323 + $0xf8] sm:$0xf]
        %v528 = vld [vmem:[%s323 + $0xfc] sm:$0xf]
        %v593 = vunpack.c.l.b16 %v401
        %v594 = vunpack.c.h.b16 %v401
        %v595 = vunpack.c.l.b16 %v402
        %v596 = vunpack.c.h.b16 %v402
        %v597 = vunpack.c.l.b16 %v403
        %v598 = vunpack.c.h.b16 %v403
        %v599 = vunpack.c.l.b16 %v404
        %v600 = vunpack.c.h.b16 %v404
        %v601 = vunpack.c.l.b16 %v405
        %v602 = vunpack.c.h.b16 %v405
        %v603 = vunpack.c.l.b16 %v406
        %v604 = vunpack.c.h.b16 %v406
        %v605 = vunpack.c.l.b16 %v407
        %v606 = vunpack.c.h.b16 %v407
        %v607 = vunpack.c.l.b16 %v408
        %v608 = vunpack.c.h.b16 %v408
        %v609 = vunpack.c.l.b16 %v409
        %v610 = vunpack.c.h.b16 %v409
        %v611 = vunpack.c.l.b16 %v410
        %v612 = vunpack.c.h.b16 %v410
        %v613 = vunpack.c.l.b16 %v411
        %v614 = vunpack.c.h.b16 %v411
        %v615 = vunpack.c.l.b16 %v412
        %v616 = vunpack.c.h.b16 %v412
        %v617 = vunpack.c.l.b16 %v413
        %v618 = vunpack.c.h.b16 %v413
        %v619 = vunpack.c.l.b16 %v414
        %v620 = vunpack.c.h.b16 %v414
        %v621 = vunpack.c.l.b16 %v415
        %v622 = vunpack.c.h.b16 %v415
        %v623 = vunpack.c.l.b16 %v416
        %v624 = vunpack.c.h.b16 %v416
        %v625 = vunpack.c.l.b16 %v417
        %v626 = vunpack.c.h.b16 %v417
        %v627 = vunpack.c.l.b16 %v418
        %v628 = vunpack.c.h.b16 %v418
        %v629 = vunpack.c.l.b16 %v419
        %v630 = vunpack.c.h.b16 %v419
        %v631 = vunpack.c.l.b16 %v420
        %v632 = vunpack.c.h.b16 %v420
        %v633 = vunpack.c.l.b16 %v421
        %v634 = vunpack.c.h.b16 %v421
        %v635 = vunpack.c.l.b16 %v422
        %v636 = vunpack.c.h.b16 %v422
        %v637 = vunpack.c.l.b16 %v423
        %v638 = vunpack.c.h.b16 %v423
        %v639 = vunpack.c.l.b16 %v424
        %v640 = vunpack.c.h.b16 %v424
        %v641 = vunpack.c.l.b16 %v425
        %v642 = vunpack.c.h.b16 %v425
        %v643 = vunpack.c.l.b16 %v426
        %v644 = vunpack.c.h.b16 %v426
        %v645 = vunpack.c.l.b16 %v427
        %v646 = vunpack.c.h.b16 %v427
        %v647 = vunpack.c.l.b16 %v428
        %v648 = vunpack.c.h.b16 %v428
        %v649 = vunpack.c.l.b16 %v429
        %v650 = vunpack.c.h.b16 %v429
        %v651 = vunpack.c.l.b16 %v430
        %v652 = vunpack.c.h.b16 %v430
        %v653 = vunpack.c.l.b16 %v431
        %v654 = vunpack.c.h.b16 %v431
        %v655 = vunpack.c.l.b16 %v432
        %v656 = vunpack.c.h.b16 %v432
        %v657 = vunpack.c.l.b16 %v433
        %v658 = vunpack.c.h.b16 %v433
        %v659 = vunpack.c.l.b16 %v434
        %v660 = vunpack.c.h.b16 %v434
        %v661 = vunpack.c.l.b16 %v435
        %v662 = vunpack.c.h.b16 %v435
        %v663 = vunpack.c.l.b16 %v436
        %v664 = vunpack.c.h.b16 %v436
        %v665 = vunpack.c.l.b16 %v437
        %v666 = vunpack.c.h.b16 %v437
        %v667 = vunpack.c.l.b16 %v438
        %v668 = vunpack.c.h.b16 %v438
        %v669 = vunpack.c.l.b16 %v439
        %v670 = vunpack.c.h.b16 %v439
        %v671 = vunpack.c.l.b16 %v440
        %v672 = vunpack.c.h.b16 %v440
        %v673 = vunpack.c.l.b16 %v441
        %v674 = vunpack.c.h.b16 %v441
        %v675 = vunpack.c.l.b16 %v442
        %v676 = vunpack.c.h.b16 %v442
        %v677 = vunpack.c.l.b16 %v443
        %v678 = vunpack.c.h.b16 %v443
        %v679 = vunpack.c.l.b16 %v444
        %v680 = vunpack.c.h.b16 %v444
        %v681 = vunpack.c.l.b16 %v445
        %v682 = vunpack.c.h.b16 %v445
        %v683 = vunpack.c.l.b16 %v446
        %v684 = vunpack.c.h.b16 %v446
        %v685 = vunpack.c.l.b16 %v447
        %v686 = vunpack.c.h.b16 %v447
        %v687 = vunpack.c.l.b16 %v448
        %v688 = vunpack.c.h.b16 %v448
        %v689 = vunpack.c.l.b16 %v449
        %v690 = vunpack.c.h.b16 %v449
        %v691 = vunpack.c.l.b16 %v450
        %v692 = vunpack.c.h.b16 %v450
        %v693 = vunpack.c.l.b16 %v451
        %v694 = vunpack.c.h.b16 %v451
        %v695 = vunpack.c.l.b16 %v452
        %v696 = vunpack.c.h.b16 %v452
        %v697 = vunpack.c.l.b16 %v453
        %v698 = vunpack.c.h.b16 %v453
        %v699 = vunpack.c.l.b16 %v454
        %v700 = vunpack.c.h.b16 %v454
        %v701 = vunpack.c.l.b16 %v455
        %v702 = vunpack.c.h.b16 %v455
        %v703 = vunpack.c.l.b16 %v456
        %v704 = vunpack.c.h.b16 %v456
        %v705 = vunpack.c.l.b16 %v457
        %v706 = vunpack.c.h.b16 %v457
        %v707 = vunpack.c.l.b16 %v458
        %v708 = vunpack.c.h.b16 %v458
        %v709 = vunpack.c.l.b16 %v459
        %v710 = vunpack.c.h.b16 %v459
        %v711 = vunpack.c.l.b16 %v460
        %v712 = vunpack.c.h.b16 %v460
        %v713 = vunpack.c.l.b16 %v461
        %v714 = vunpack.c.h.b16 %v461
        %v715 = vunpack.c.l.b16 %v462
        %v716 = vunpack.c.h.b16 %v462
        %v717 = vunpack.c.l.b16 %v463
        %v718 = vunpack.c.h.b16 %v463
        %v719 = vunpack.c.l.b16 %v464
        %v720 = vunpack.c.h.b16 %v464
        %v721 = vpack.c.b16 %v597, %v593
        %v722 = vpack.c.b16 %v598, %v594
        %v723 = vpack.c.b16 %v599, %v595
        %v724 = vpack.c.b16 %v600, %v596
        %v725 = vpack.c.b16 %v605, %v601
        %v726 = vpack.c.b16 %v606, %v602
        %v727 = vpack.c.b16 %v607, %v603
        %v728 = vpack.c.b16 %v608, %v604
        %v729 = vpack.c.b16 %v613, %v609
        %v730 = vpack.c.b16 %v614, %v610
        %v731 = vpack.c.b16 %v615, %v611
        %v732 = vpack.c.b16 %v616, %v612
        %v733 = vpack.c.b16 %v621, %v617
        %v734 = vpack.c.b16 %v622, %v618
        %v735 = vpack.c.b16 %v623, %v619
        %v736 = vpack.c.b16 %v624, %v620
        %v737 = vpack.c.b16 %v629, %v625
        %v738 = vpack.c.b16 %v630, %v626
        %v739 = vpack.c.b16 %v631, %v627
        %v740 = vpack.c.b16 %v632, %v628
        %v741 = vpack.c.b16 %v637, %v633
        %v742 = vpack.c.b16 %v638, %v634
        %v743 = vpack.c.b16 %v639, %v635
        %v744 = vpack.c.b16 %v640, %v636
        %v745 = vpack.c.b16 %v645, %v641
        %v746 = vpack.c.b16 %v646, %v642
        %v747 = vpack.c.b16 %v647, %v643
        %v748 = vpack.c.b16 %v648, %v644
        %v749 = vpack.c.b16 %v653, %v649
        %v750 = vpack.c.b16 %v654, %v650
        %v751 = vpack.c.b16 %v655, %v651
        %v752 = vpack.c.b16 %v656, %v652
        %v753 = vpack.c.b16 %v661, %v657
        %v754 = vpack.c.b16 %v662, %v658
        %v755 = vpack.c.b16 %v663, %v659
        %v756 = vpack.c.b16 %v664, %v660
        %v757 = vpack.c.b16 %v669, %v665
        %v758 = vpack.c.b16 %v670, %v666
        %v759 = vpack.c.b16 %v671, %v667
        %v760 = vpack.c.b16 %v672, %v668
        %v761 = vpack.c.b16 %v677, %v673
        %v762 = vpack.c.b16 %v678, %v674
        %v763 = vpack.c.b16 %v679, %v675
        %v764 = vpack.c.b16 %v680, %v676
        %v765 = vpack.c.b16 %v685, %v681
        %v766 = vpack.c.b16 %v686, %v682
        %v767 = vpack.c.b16 %v687, %v683
        %v768 = vpack.c.b16 %v688, %v684
        %v769 = vpack.c.b16 %v693, %v689
        %v770 = vpack.c.b16 %v694, %v690
        %v771 = vpack.c.b16 %v695, %v691
        %v772 = vpack.c.b16 %v696, %v692
        %v773 = vpack.c.b16 %v701, %v697
        %v774 = vpack.c.b16 %v702, %v698
        %v775 = vpack.c.b16 %v703, %v699
        %v776 = vpack.c.b16 %v704, %v700
        %v777 = vpack.c.b16 %v709, %v705
        %v778 = vpack.c.b16 %v710, %v706
        %v779 = vpack.c.b16 %v711, %v707
        %v780 = vpack.c.b16 %v712, %v708
        %v781 = vpack.c.b16 %v717, %v713
        %v782 = vpack.c.b16 %v718, %v714
        %v783 = vpack.c.b16 %v719, %v715
        %v784 = vpack.c.b16 %v720, %v716
        %v913 = vunpack.c.l.b16 %v465
        %v914 = vunpack.c.l.b16 %v466
        %v915 = vunpack.c.l.b16 %v467
        %v916 = vunpack.c.l.b16 %v468
        %v917 = vunpack.c.l.b16 %v469
        %v918 = vunpack.c.l.b16 %v470
        %v919 = vunpack.c.l.b16 %v471
        %v920 = vunpack.c.l.b16 %v472
        %v921 = vunpack.c.l.b16 %v473
        %v922 = vunpack.c.l.b16 %v474
        %v923 = vunpack.c.l.b16 %v475
        %v924 = vunpack.c.l.b16 %v476
        %v925 = vunpack.c.l.b16 %v477
        %v926 = vunpack.c.l.b16 %v478
        %v927 = vunpack.c.l.b16 %v479
        %v928 = vunpack.c.l.b16 %v480
        %v929 = vunpack.c.l.b16 %v481
        %v930 = vunpack.c.l.b16 %v482
        %v931 = vunpack.c.l.b16 %v483
        %v932 = vunpack.c.l.b16 %v484
        %v933 = vunpack.c.l.b16 %v485
        %v934 = vunpack.c.l.b16 %v486
        %v935 = vunpack.c.l.b16 %v487
        %v936 = vunpack.c.l.b16 %v488
        %v937 = vunpack.c.l.b16 %v489
        %v938 = vunpack.c.l.b16 %v490
        %v939 = vunpack.c.l.b16 %v491
        %v940 = vunpack.c.l.b16 %v492
        %v941 = vunpack.c.l.b16 %v493
        %v942 = vunpack.c.l.b16 %v494
        %v943 = vunpack.c.l.b16 %v495
        %v944 = vunpack.c.l.b16 %v496
        %v945 = vunpack.c.l.b16 %v497
        %v946 = vunpack.c.l.b16 %v498
        %v947 = vunpack.c.l.b16 %v499
        %v948 = vunpack.c.l.b16 %v500
        %v949 = vunpack.c.l.b16 %v501
        %v950 = vunpack.c.l.b16 %v502
        %v951 = vunpack.c.l.b16 %v503
        %v952 = vunpack.c.l.b16 %v504
        %v953 = vunpack.c.l.b16 %v505
        %v954 = vunpack.c.l.b16 %v506
        %v955 = vunpack.c.l.b16 %v507
        %v956 = vunpack.c.l.b16 %v508
        %v957 = vunpack.c.l.b16 %v509
        %v958 = vunpack.c.l.b16 %v510
        %v959 = vunpack.c.l.b16 %v511
        %v960 = vunpack.c.l.b16 %v512
        %v961 = vunpack.c.l.b16 %v513
        %v962 = vunpack.c.l.b16 %v514
        %v963 = vunpack.c.l.b16 %v515
        %v964 = vunpack.c.l.b16 %v516
        %v965 = vunpack.c.l.b16 %v517
        %v966 = vunpack.c.l.b16 %v518
        %v967 = vunpack.c.l.b16 %v519
        %v968 = vunpack.c.l.b16 %v520
        %v969 = vunpack.c.l.b16 %v521
        %v970 = vunpack.c.l.b16 %v522
        %v971 = vunpack.c.l.b16 %v523
        %v972 = vunpack.c.l.b16 %v524
        %v973 = vunpack.c.l.b16 %v525
        %v974 = vunpack.c.l.b16 %v526
        %v975 = vunpack.c.l.b16 %v527
        %v976 = vunpack.c.l.b16 %v528
        %v977 = vpack.c.b16 %v914, %v913
        %v978 = vpack.c.b16 %v916, %v915
        %v979 = vpack.c.b16 %v918, %v917
        %v980 = vpack.c.b16 %v920, %v919
        %v981 = vpack.c.b16 %v922, %v921
        %v982 = vpack.c.b16 %v924, %v923
        %v983 = vpack.c.b16 %v926, %v925
        %v984 = vpack.c.b16 %v928, %v927
        %v985 = vpack.c.b16 %v930, %v929
        %v986 = vpack.c.b16 %v932, %v931
        %v987 = vpack.c.b16 %v934, %v933
        %v988 = vpack.c.b16 %v936, %v935
        %v989 = vpack.c.b16 %v938, %v937
        %v990 = vpack.c.b16 %v940, %v939
        %v991 = vpack.c.b16 %v942, %v941
        %v992 = vpack.c.b16 %v944, %v943
        %v993 = vpack.c.b16 %v946, %v945
        %v994 = vpack.c.b16 %v948, %v947
        %v995 = vpack.c.b16 %v950, %v949
        %v996 = vpack.c.b16 %v952, %v951
        %v997 = vpack.c.b16 %v954, %v953
        %v998 = vpack.c.b16 %v956, %v955
        %v999 = vpack.c.b16 %v958, %v957
        %v1000 = vpack.c.b16 %v960, %v959
        %v1001 = vpack.c.b16 %v962, %v961
        %v1002 = vpack.c.b16 %v964, %v963
        %v1003 = vpack.c.b16 %v966, %v965
        %v1004 = vpack.c.b16 %v968, %v967
        %v1005 = vpack.c.b16 %v970, %v969
        %v1006 = vpack.c.b16 %v972, %v971
        %v1007 = vpack.c.b16 %v974, %v973
        %v1008 = vpack.c.b16 %v976, %v975
        %1041 = vmatprep.subr.bf16.mxu0 0
        %1042 = vmatpush1.bf16.msra.mxu0 %v977
        %1043 = vmatprep.subr.bf16.mxu0 0
        %1044 = vmatpush1.bf16.msra.mxu0 %v978
        %1045 = vmatprep.subr.bf16.mxu0 0
        %1046 = vmatpush1.bf16.msra.mxu0 %v979
        %1047 = vmatprep.subr.bf16.mxu0 0
        %1048 = vmatpush1.bf16.msra.mxu0 %v980
        %1049 = vmatprep.subr.bf16.mxu0 0
        %1050 = vmatpush1.bf16.msra.mxu0 %v981
        %1051 = vmatprep.subr.bf16.mxu0 0
        %1052 = vmatpush1.bf16.msra.mxu0 %v982
        %1053 = vmatprep.subr.bf16.mxu0 0
        %1054 = vmatpush1.bf16.msra.mxu0 %v983
        %1055 = vmatprep.subr.bf16.mxu0 0
        %1056 = vmatpush1.bf16.msra.mxu0 %v984
        %1057 = vmatprep.subr.bf16.mxu0 0
        %1058 = vmatpush1.bf16.msra.mxu0 %v985
        %1059 = vmatprep.subr.bf16.mxu0 0
        %1060 = vmatpush1.bf16.msra.mxu0 %v986
        %1061 = vmatprep.subr.bf16.mxu0 0
        %1062 = vmatpush1.bf16.msra.mxu0 %v987
        %1063 = vmatprep.subr.bf16.mxu0 0
        %1064 = vmatpush1.bf16.msra.mxu0 %v988
        %1065 = vmatprep.subr.bf16.mxu0 0
        %1066 = vmatpush1.bf16.msra.mxu0 %v989
        %1067 = vmatprep.subr.bf16.mxu0 0
        %1068 = vmatpush1.bf16.msra.mxu0 %v990
        %1069 = vmatprep.subr.bf16.mxu0 0
        %1070 = vmatpush1.bf16.msra.mxu0 %v991
        %1071 = vmatprep.subr.bf16.mxu0 0
        %1072 = vmatpush1.bf16.msra.mxu0 %v992
        %1073 = vmatprep.mubr.bf16.mxu0 %v722
        %1074 = vmatmul.mubr.bf16.gmra.mrb[0].mxu0 %v721
        %v1075 = vpop.f32.mrb[0].mxu0
        %v1076 = vadd.f32 0.0, %v1075
        %v1077 = vpop.f32.mrb[0].mxu0
        %v1078 = vpop.f32.mrb[0].mxu0
        %v1079 = vadd.f32 0.0, %v1078
        %v1080 = vpop.f32.mrb[0].mxu0
        %1081 = vmatprep.mubr.bf16.mxu0 %v726
        %1082 = vmatmul.mubr.bf16.gmra.mrb[0].mxu0 %v725
        %v1083 = vpop.f32.mrb[0].mxu0
        %v1084 = vadd.f32 0.0, %v1083
        %v1085 = vpop.f32.mrb[0].mxu0
        %v1086 = vpop.f32.mrb[0].mxu0
        %v1087 = vadd.f32 0.0, %v1086
        %v1088 = vpop.f32.mrb[0].mxu0
        %1089 = vmatprep.mubr.bf16.mxu0 %v730
        %1090 = vmatmul.mubr.bf16.gmra.mrb[0].mxu0 %v729
        %v1091 = vpop.f32.mrb[0].mxu0
        %v1092 = vadd.f32 0.0, %v1091
        %v1093 = vpop.f32.mrb[0].mxu0
        %v1094 = vpop.f32.mrb[0].mxu0
        %v1095 = vadd.f32 0.0, %v1094
        %v1096 = vpop.f32.mrb[0].mxu0
        %1097 = vmatprep.mubr.bf16.mxu0 %v734
        %1098 = vmatmul.mubr.bf16.gmra.mrb[0].mxu0 %v733
        %v1099 = vpop.f32.mrb[0].mxu0
        %v1100 = vadd.f32 0.0, %v1099
        %v1101 = vpop.f32.mrb[0].mxu0
        %v1102 = vpop.f32.mrb[0].mxu0
        %v1103 = vadd.f32 0.0, %v1102
        %v1104 = vpop.f32.mrb[0].mxu0
        %1105 = vmatprep.mubr.bf16.mxu0 %v738
        %1106 = vmatmul.mubr.bf16.gmra.mrb[0].mxu0 %v737
        %v1107 = vpop.f32.mrb[0].mxu0
        %v1108 = vadd.f32 0.0, %v1107
        %v1109 = vpop.f32.mrb[0].mxu0
        %v1110 = vpop.f32.mrb[0].mxu0
        %v1111 = vadd.f32 0.0, %v1110
        %v1112 = vpop.f32.mrb[0].mxu0
        %1113 = vmatprep.mubr.bf16.mxu0 %v742
        %1114 = vmatmul.mubr.bf16.gmra.mrb[0].mxu0 %v741
        %v1115 = vpop.f32.mrb[0].mxu0
        %v1116 = vadd.f32 0.0, %v1115
        %v1117 = vpop.f32.mrb[0].mxu0
        %v1118 = vpop.f32.mrb[0].mxu0
        %v1119 = vadd.f32 0.0, %v1118
        %v1120 = vpop.f32.mrb[0].mxu0
        %1121 = vmatprep.mubr.bf16.mxu0 %v746
        %1122 = vmatmul.mubr.bf16.gmra.mrb[0].mxu0 %v745
        %v1123 = vpop.f32.mrb[0].mxu0
        %v1124 = vadd.f32 0.0, %v1123
        %v1125 = vpop.f32.mrb[0].mxu0
        %v1126 = vpop.f32.mrb[0].mxu0
        %v1127 = vadd.f32 0.0, %v1126
        %v1128 = vpop.f32.mrb[0].mxu0
        %1129 = vmatprep.mubr.bf16.mxu0 %v750
        %1130 = vmatmul.mubr.bf16.gmra.mrb[0].mxu0 %v749
        %v1131 = vpop.f32.mrb[0].mxu0
        %v1132 = vadd.f32 0.0, %v1131
        %v1133 = vpop.f32.mrb[0].mxu0
        %v1134 = vpop.f32.mrb[0].mxu0
        %v1135 = vadd.f32 0.0, %v1134
        %v1136 = vpop.f32.mrb[0].mxu0
        %1137 = vmatprep.mubr.bf16.mxu0 %v754
        %1138 = vmatmul.mubr.bf16.gmra.mrb[0].mxu0 %v753
        %v1139 = vpop.f32.mrb[0].mxu0
        %v1140 = vadd.f32 0.0, %v1139
        %v1141 = vpop.f32.mrb[0].mxu0
        %v1142 = vpop.f32.mrb[0].mxu0
        %v1143 = vadd.f32 0.0, %v1142
        %v1144 = vpop.f32.mrb[0].mxu0
        %1145 = vmatprep.mubr.bf16.mxu0 %v758
        %1146 = vmatmul.mubr.bf16.gmra.mrb[0].mxu0 %v757
        %v1147 = vpop.f32.mrb[0].mxu0
        %v1148 = vadd.f32 0.0, %v1147
        %v1149 = vpop.f32.mrb[0].mxu0
        %v1150 = vpop.f32.mrb[0].mxu0
        %v1151 = vadd.f32 0.0, %v1150
        %v1152 = vpop.f32.mrb[0].mxu0
        %1153 = vmatprep.mubr.bf16.mxu0 %v762
        %1154 = vmatmul.mubr.bf16.gmra.mrb[0].mxu0 %v761
        %v1155 = vpop.f32.mrb[0].mxu0
        %v1156 = vadd.f32 0.0, %v1155
        %v1157 = vpop.f32.mrb[0].mxu0
        %v1158 = vpop.f32.mrb[0].mxu0
        %v1159 = vadd.f32 0.0, %v1158
        %v1160 = vpop.f32.mrb[0].mxu0
        %1161 = vmatprep.mubr.bf16.mxu0 %v766
        %1162 = vmatmul.mubr.bf16.gmra.mrb[0].mxu0 %v765
        %v1163 = vpop.f32.mrb[0].mxu0
        %v1164 = vadd.f32 0.0, %v1163
        %v1165 = vpop.f32.mrb[0].mxu0
        %v1166 = vpop.f32.mrb[0].mxu0
        %v1167 = vadd.f32 0.0, %v1166
        %v1168 = vpop.f32.mrb[0].mxu0
        %1169 = vmatprep.mubr.bf16.mxu0 %v770
        %1170 = vmatmul.mubr.bf16.gmra.mrb[0].mxu0 %v769
        %v1171 = vpop.f32.mrb[0].mxu0
        %v1172 = vadd.f32 0.0, %v1171
        %v1173 = vpop.f32.mrb[0].mxu0
        %v1174 = vpop.f32.mrb[0].mxu0
        %v1175 = vadd.f32 0.0, %v1174
        %v1176 = vpop.f32.mrb[0].mxu0
        %1177 = vmatprep.mubr.bf16.mxu0 %v774
        %1178 = vmatmul.mubr.bf16.gmra.mrb[0].mxu0 %v773
        %v1179 = vpop.f32.mrb[0].mxu0
        %v1180 = vadd.f32 0.0, %v1179
        %v1181 = vpop.f32.mrb[0].mxu0
        %v1182 = vpop.f32.mrb[0].mxu0
        %v1183 = vadd.f32 0.0, %v1182
        %v1184 = vpop.f32.mrb[0].mxu0
        %1185 = vmatprep.mubr.bf16.mxu0 %v778
        %1186 = vmatmul.mubr.bf16.gmra.mrb[0].mxu0 %v777
        %v1187 = vpop.f32.mrb[0].mxu0
        %v1188 = vadd.f32 0.0, %v1187
        %v1189 = vpop.f32.mrb[0].mxu0
        %v1190 = vpop.f32.mrb[0].mxu0
        %v1191 = vadd.f32 0.0, %v1190
        %v1192 = vpop.f32.mrb[0].mxu0
        %1193 = vmatprep.mubr.bf16.mxu0 %v782
        %1194 = vmatmul.mubr.bf16.gmra.mrb[0].mxu0 %v781
        %v1195 = vpop.f32.mrb[0].mxu0
        %v1196 = vadd.f32 0.0, %v1195
        %v1197 = vpop.f32.mrb[0].mxu0
        %v1198 = vpop.f32.mrb[0].mxu0
        %v1199 = vadd.f32 0.0, %v1198
        %v1200 = vpop.f32.mrb[0].mxu0
        %1201 = vdwg.mxu0
        %1202 = vmatprep.subr.bf16.mxu0 0
        %1203 = vmatpush1.bf16.msra.mxu0 %v993
        %1204 = vmatprep.subr.bf16.mxu0 0
        %1205 = vmatpush1.bf16.msra.mxu0 %v994
        %1206 = vmatprep.subr.bf16.mxu0 0
        %1207 = vmatpush1.bf16.msra.mxu0 %v995
        %1208 = vmatprep.subr.bf16.mxu0 0
        %1209 = vmatpush1.bf16.msra.mxu0 %v996
        %1210 = vmatprep.subr.bf16.mxu0 0
        %1211 = vmatpush1.bf16.msra.mxu0 %v997
        %1212 = vmatprep.subr.bf16.mxu0 0
        %1213 = vmatpush1.bf16.msra.mxu0 %v998
        %1214 = vmatprep.subr.bf16.mxu0 0
        %1215 = vmatpush1.bf16.msra.mxu0 %v999
        %1216 = vmatprep.subr.bf16.mxu0 0
        %1217 = vmatpush1.bf16.msra.mxu0 %v1000
        %1218 = vmatprep.subr.bf16.mxu0 0
        %1219 = vmatpush1.bf16.msra.mxu0 %v1001
        %1220 = vmatprep.subr.bf16.mxu0 0
        %1221 = vmatpush1.bf16.msra.mxu0 %v1002
        %1222 = vmatprep.subr.bf16.mxu0 0
        %1223 = vmatpush1.bf16.msra.mxu0 %v1003
        %1224 = vmatprep.subr.bf16.mxu0 0
        %1225 = vmatpush1.bf16.msra.mxu0 %v1004
        %1226 = vmatprep.subr.bf16.mxu0 0
        %1227 = vmatpush1.bf16.msra.mxu0 %v1005
        %1228 = vmatprep.subr.bf16.mxu0 0
        %1229 = vmatpush1.bf16.msra.mxu0 %v1006
        %1230 = vmatprep.subr.bf16.mxu0 0
        %1231 = vmatpush1.bf16.msra.mxu0 %v1007
        %1232 = vmatprep.subr.bf16.mxu0 0
        %1233 = vmatpush1.bf16.msra.mxu0 %v1008
        %1234 = vmatprep.mubr.bf16.mxu0 %v724
        %1235 = vmatmul.mubr.bf16.gmra.mrb[0].mxu0 %v723
        %v1236 = vpop.f32.mrb[0].mxu0
        %v1237 = vadd.f32 %v1076, %v1236
        %v1238 = vpop.f32.mrb[0].mxu0
        %v1239 = vpop.f32.mrb[0].mxu0
        %v1240 = vadd.f32 %v1079, %v1239
        %v1241 = vpop.f32.mrb[0].mxu0
        %1242 = vmatprep.mubr.bf16.mxu0 %v728
        %1243 = vmatmul.mubr.bf16.gmra.mrb[0].mxu0 %v727
        %v1244 = vpop.f32.mrb[0].mxu0
        %v1245 = vadd.f32 %v1084, %v1244
        %v1246 = vpop.f32.mrb[0].mxu0
        %v1247 = vpop.f32.mrb[0].mxu0
        %v1248 = vadd.f32 %v1087, %v1247
        %v1249 = vpop.f32.mrb[0].mxu0
        %1250 = vmatprep.mubr.bf16.mxu0 %v732
        %1251 = vmatmul.mubr.bf16.gmra.mrb[0].mxu0 %v731
        %v1252 = vpop.f32.mrb[0].mxu0
        %v1253 = vadd.f32 %v1092, %v1252
        %v1254 = vpop.f32.mrb[0].mxu0
        %v1255 = vpop.f32.mrb[0].mxu0
        %v1256 = vadd.f32 %v1095, %v1255
        %v1257 = vpop.f32.mrb[0].mxu0
        %1258 = vmatprep.mubr.bf16.mxu0 %v736
        %1259 = vmatmul.mubr.bf16.gmra.mrb[0].mxu0 %v735
        %v1260 = vpop.f32.mrb[0].mxu0
        %v1261 = vadd.f32 %v1100, %v1260
        %v1262 = vpop.f32.mrb[0].mxu0
        %v1263 = vpop.f32.mrb[0].mxu0
        %v1264 = vadd.f32 %v1103, %v1263
        %v1265 = vpop.f32.mrb[0].mxu0
        %1266 = vmatprep.mubr.bf16.mxu0 %v740
        %1267 = vmatmul.mubr.bf16.gmra.mrb[0].mxu0 %v739
        %v1268 = vpop.f32.mrb[0].mxu0
        %v1269 = vadd.f32 %v1108, %v1268
        %v1270 = vpop.f32.mrb[0].mxu0
        %v1271 = vpop.f32.mrb[0].mxu0
        %v1272 = vadd.f32 %v1111, %v1271
        %v1273 = vpop.f32.mrb[0].mxu0
        %1274 = vmatprep.mubr.bf16.mxu0 %v744
        %1275 = vmatmul.mubr.bf16.gmra.mrb[0].mxu0 %v743
        %v1276 = vpop.f32.mrb[0].mxu0
        %v1277 = vadd.f32 %v1116, %v1276
        %v1278 = vpop.f32.mrb[0].mxu0
        %v1279 = vpop.f32.mrb[0].mxu0
        %v1280 = vadd.f32 %v1119, %v1279
        %v1281 = vpop.f32.mrb[0].mxu0
        %1282 = vmatprep.mubr.bf16.mxu0 %v748
        %1283 = vmatmul.mubr.bf16.gmra.mrb[0].mxu0 %v747
        %v1284 = vpop.f32.mrb[0].mxu0
        %v1285 = vadd.f32 %v1124, %v1284
        %v1286 = vpop.f32.mrb[0].mxu0
        %v1287 = vpop.f32.mrb[0].mxu0
        %v1288 = vadd.f32 %v1127, %v1287
        %v1289 = vpop.f32.mrb[0].mxu0
        %1290 = vmatprep.mubr.bf16.mxu0 %v752
        %1291 = vmatmul.mubr.bf16.gmra.mrb[0].mxu0 %v751
        %v1292 = vpop.f32.mrb[0].mxu0
        %v1293 = vadd.f32 %v1132, %v1292
        %v1294 = vpop.f32.mrb[0].mxu0
        %v1295 = vpop.f32.mrb[0].mxu0
        %v1296 = vadd.f32 %v1135, %v1295
        %v1297 = vpop.f32.mrb[0].mxu0
        %1298 = vmatprep.mubr.bf16.mxu0 %v756
        %1299 = vmatmul.mubr.bf16.gmra.mrb[0].mxu0 %v755
        %v1300 = vpop.f32.mrb[0].mxu0
        %v1301 = vadd.f32 %v1140, %v1300
        %v1302 = vpop.f32.mrb[0].mxu0
        %v1303 = vpop.f32.mrb[0].mxu0
        %v1304 = vadd.f32 %v1143, %v1303
        %v1305 = vpop.f32.mrb[0].mxu0
        %1306 = vmatprep.mubr.bf16.mxu0 %v760
        %1307 = vmatmul.mubr.bf16.gmra.mrb[0].mxu0 %v759
        %v1308 = vpop.f32.mrb[0].mxu0
        %v1309 = vadd.f32 %v1148, %v1308
        %v1310 = vpop.f32.mrb[0].mxu0
        %v1311 = vpop.f32.mrb[0].mxu0
        %v1312 = vadd.f32 %v1151, %v1311
        %v1313 = vpop.f32.mrb[0].mxu0
        %1314 = vmatprep.mubr.bf16.mxu0 %v764
        %1315 = vmatmul.mubr.bf16.gmra.mrb[0].mxu0 %v763
        %v1316 = vpop.f32.mrb[0].mxu0
        %v1317 = vadd.f32 %v1156, %v1316
        %v1318 = vpop.f32.mrb[0].mxu0
        %v1319 = vpop.f32.mrb[0].mxu0
        %v1320 = vadd.f32 %v1159, %v1319
        %v1321 = vpop.f32.mrb[0].mxu0
        %1322 = vmatprep.mubr.bf16.mxu0 %v768
        %1323 = vmatmul.mubr.bf16.gmra.mrb[0].mxu0 %v767
        %v1324 = vpop.f32.mrb[0].mxu0
        %v1325 = vadd.f32 %v1164, %v1324
        %v1326 = vpop.f32.mrb[0].mxu0
        %v1327 = vpop.f32.mrb[0].mxu0
        %v1328 = vadd.f32 %v1167, %v1327
        %v1329 = vpop.f32.mrb[0].mxu0
        %1330 = vmatprep.mubr.bf16.mxu0 %v772
        %1331 = vmatmul.mubr.bf16.gmra.mrb[0].mxu0 %v771
        %v1332 = vpop.f32.mrb[0].mxu0
        %v1333 = vadd.f32 %v1172, %v1332
        %v1334 = vpop.f32.mrb[0].mxu0
        %v1335 = vpop.f32.mrb[0].mxu0
        %v1336 = vadd.f32 %v1175, %v1335
        %v1337 = vpop.f32.mrb[0].mxu0
        %1338 = vmatprep.mubr.bf16.mxu0 %v776
        %1339 = vmatmul.mubr.bf16.gmra.mrb[0].mxu0 %v775
        %v1340 = vpop.f32.mrb[0].mxu0
        %v1341 = vadd.f32 %v1180, %v1340
        %v1342 = vpop.f32.mrb[0].mxu0
        %v1343 = vpop.f32.mrb[0].mxu0
        %v1344 = vadd.f32 %v1183, %v1343
        %v1345 = vpop.f32.mrb[0].mxu0
        %1346 = vmatprep.mubr.bf16.mxu0 %v780
        %1347 = vmatmul.mubr.bf16.gmra.mrb[0].mxu0 %v779
        %v1348 = vpop.f32.mrb[0].mxu0
        %v1349 = vadd.f32 %v1188, %v1348
        %v1350 = vpop.f32.mrb[0].mxu0
        %v1351 = vpop.f32.mrb[0].mxu0
        %v1352 = vadd.f32 %v1191, %v1351
        %v1353 = vpop.f32.mrb[0].mxu0
        %1354 = vmatprep.mubr.bf16.mxu0 %v784
        %1355 = vmatmul.mubr.bf16.gmra.mrb[0].mxu0 %v783
        %v1356 = vpop.f32.mrb[0].mxu0
        %v1357 = vadd.f32 %v1196, %v1356
        %v1358 = vpop.f32.mrb[0].mxu0
        %v1359 = vpop.f32.mrb[0].mxu0
        %v1360 = vadd.f32 %v1199, %v1359
        %v1361 = vpop.f32.mrb[0].mxu0
        %1362 = vdwg.mxu0
        %v1363 = vadd.f32 %v369, %v1237
        %v1364 = vadd.f32 %v370, %v1240
        %v1365 = vadd.f32 %v371, %v1245
        %v1366 = vadd.f32 %v372, %v1248
        %v1367 = vadd.f32 %v373, %v1253
        %v1368 = vadd.f32 %v374, %v1256
        %v1369 = vadd.f32 %v375, %v1261
        %v1370 = vadd.f32 %v376, %v1264
        %v1371 = vadd.f32 %v377, %v1269
        %v1372 = vadd.f32 %v378, %v1272
        %v1373 = vadd.f32 %v379, %v1277
        %v1374 = vadd.f32 %v380, %v1280
        %v1375 = vadd.f32 %v381, %v1285
        %v1376 = vadd.f32 %v382, %v1288
        %v1377 = vadd.f32 %v383, %v1293
        %v1378 = vadd.f32 %v384, %v1296
        %v1379 = vadd.f32 %v385, %v1301
        %v1380 = vadd.f32 %v386, %v1304
        %v1381 = vadd.f32 %v387, %v1309
        %v1382 = vadd.f32 %v388, %v1312
        %v1383 = vadd.f32 %v389, %v1317
        %v1384 = vadd.f32 %v390, %v1320
        %v1385 = vadd.f32 %v391, %v1325
        %v1386 = vadd.f32 %v392, %v1328
        %v1387 = vadd.f32 %v393, %v1333
        %v1388 = vadd.f32 %v394, %v1336
        %v1389 = vadd.f32 %v395, %v1341
        %v1390 = vadd.f32 %v396, %v1344
        %v1391 = vadd.f32 %v397, %v1349
        %v1392 = vadd.f32 %v398, %v1352
        %v1393 = vadd.f32 %v399, %v1357
        %v1394 = vadd.f32 %v400, %v1360
        %vm1395 = vcmask 523264
        %1396 = vst.msk [vmem:[#allocation2] sm:$0xff] %vm1395, %v1363
        %1397 = vst.msk [vmem:[#allocation2 + $0x8] sm:$0xff] %vm1395, %v1364
        %1398 = vst.msk [vmem:[#allocation2 + $0x10] sm:$0xff] %vm1395, %v1365
        %1399 = vst.msk [vmem:[#allocation2 + $0x18] sm:$0xff] %vm1395, %v1366
        %1400 = vst.msk [vmem:[#allocation2 + $0x20] sm:$0xff] %vm1395, %v1367
        %1401 = vst.msk [vmem:[#allocation2 + $0x28] sm:$0xff] %vm1395, %v1368
        %1402 = vst.msk [vmem:[#allocation2 + $0x30] sm:$0xff] %vm1395, %v1369
        %1403 = vst.msk [vmem:[#allocation2 + $0x38] sm:$0xff] %vm1395, %v1370
        %1404 = vst.msk [vmem:[#allocation2 + $0x40] sm:$0xff] %vm1395, %v1371
        %1405 = vst.msk [vmem:[#allocation2 + $0x48] sm:$0xff] %vm1395, %v1372
        %1406 = vst.msk [vmem:[#allocation2 + $0x50] sm:$0xff] %vm1395, %v1373
        %1407 = vst.msk [vmem:[#allocation2 + $0x58] sm:$0xff] %vm1395, %v1374
        %1408 = vst.msk [vmem:[#allocation2 + $0x60] sm:$0xff] %vm1395, %v1375
        %1409 = vst.msk [vmem:[#allocation2 + $0x68] sm:$0xff] %vm1395, %v1376
        %1410 = vst.msk [vmem:[#allocation2 + $0x70] sm:$0xff] %vm1395, %v1377
        %1411 = vst.msk [vmem:[#allocation2 + $0x78] sm:$0xff] %vm1395, %v1378
        %1412 = vst.msk [vmem:[#allocation2 + $0x80] sm:$0xff] %vm1395, %v1379
        %1413 = vst.msk [vmem:[#allocation2 + $0x88] sm:$0xff] %vm1395, %v1380
        %1414 = vst.msk [vmem:[#allocation2 + $0x90] sm:$0xff] %vm1395, %v1381
        %1415 = vst.msk [vmem:[#allocation2 + $0x98] sm:$0xff] %vm1395, %v1382
        %1416 = vst.msk [vmem:[#allocation2 + $0xa0] sm:$0xff] %vm1395, %v1383
        %1417 = vst.msk [vmem:[#allocation2 + $0xa8] sm:$0xff] %vm1395, %v1384
        %1418 = vst.msk [vmem:[#allocation2 + $0xb0] sm:$0xff] %vm1395, %v1385
        %1419 = vst.msk [vmem:[#allocation2 + $0xb8] sm:$0xff] %vm1395, %v1386
        %1420 = vst.msk [vmem:[#allocation2 + $0xc0] sm:$0xff] %vm1395, %v1387
        %1421 = vst.msk [vmem:[#allocation2 + $0xc8] sm:$0xff] %vm1395, %v1388
        %1422 = vst.msk [vmem:[#allocation2 + $0xd0] sm:$0xff] %vm1395, %v1389
        %1423 = vst.msk [vmem:[#allocation2 + $0xd8] sm:$0xff] %vm1395, %v1390
        %1424 = vst.msk [vmem:[#allocation2 + $0xe0] sm:$0xff] %vm1395, %v1391
        %1425 = vst.msk [vmem:[#allocation2 + $0xe8] sm:$0xff] %vm1395, %v1392
        %1426 = vst.msk [vmem:[#allocation2 + $0xf0] sm:$0xff] %vm1395, %v1393
        %1427 = vst.msk [vmem:[#allocation2 + $0xf8] sm:$0xff] %vm1395, %v1394
        // Predicated region
        $region53: #{tpu_custom_call.1} parent=43 // pred_check
          %p1428 = pneg %p332
        $region54: #{tpu_custom_call.1} parent=43 // pred_check_branch
          %1430 = sbr.rel (%p1428) target = $region56
        $region55: #{tpu_custom_call.1} parent=43 // pred_region
          %v1431 = vld [vmem:[#allocation2] sm:$0xff]
          %v1432 = vld [vmem:[#allocation2 + $0x8] sm:$0xff]
          %v1433 = vld [vmem:[#allocation2 + $0x10] sm:$0xff]
          %v1434 = vld [vmem:[#allocation2 + $0x18] sm:$0xff]
          %v1435 = vld [vmem:[#allocation2 + $0x20] sm:$0xff]
          %v1436 = vld [vmem:[#allocation2 + $0x28] sm:$0xff]
          %v1437 = vld [vmem:[#allocation2 + $0x30] sm:$0xff]
          %v1438 = vld [vmem:[#allocation2 + $0x38] sm:$0xff]
          %v1439 = vld [vmem:[#allocation2 + $0x40] sm:$0xff]
          %v1440 = vld [vmem:[#allocation2 + $0x48] sm:$0xff]
          %v1441 = vld [vmem:[#allocation2 + $0x50] sm:$0xff]
          %v1442 = vld [vmem:[#allocation2 + $0x58] sm:$0xff]
          %v1443 = vld [vmem:[#allocation2 + $0x60] sm:$0xff]
          %v1444 = vld [vmem:[#allocation2 + $0x68] sm:$0xff]
          %v1445 = vld [vmem:[#allocation2 + $0x70] sm:$0xff]
          %v1446 = vld [vmem:[#allocation2 + $0x78] sm:$0xff]
          %v1447 = vld [vmem:[#allocation2 + $0x80] sm:$0xff]
          %v1448 = vld [vmem:[#allocation2 + $0x88] sm:$0xff]
          %v1449 = vld [vmem:[#allocation2 + $0x90] sm:$0xff]
          %v1450 = vld [vmem:[#allocation2 + $0x98] sm:$0xff]
          %v1451 = vld [vmem:[#allocation2 + $0xa0] sm:$0xff]
          %v1452 = vld [vmem:[#allocation2 + $0xa8] sm:$0xff]
          %v1453 = vld [vmem:[#allocation2 + $0xb0] sm:$0xff]
          %v1454 = vld [vmem:[#allocation2 + $0xb8] sm:$0xff]
          %v1455 = vld [vmem:[#allocation2 + $0xc0] sm:$0xff]
          %v1456 = vld [vmem:[#allocation2 + $0xc8] sm:$0xff]
          %v1457 = vld [vmem:[#allocation2 + $0xd0] sm:$0xff]
          %v1458 = vld [vmem:[#allocation2 + $0xd8] sm:$0xff]
          %v1459 = vld [vmem:[#allocation2 + $0xe0] sm:$0xff]
          %v1460 = vld [vmem:[#allocation2 + $0xe8] sm:$0xff]
          %v1461 = vld [vmem:[#allocation2 + $0xf0] sm:$0xff]
          %v1462 = vld [vmem:[#allocation2 + $0xf8] sm:$0xff]
          %v1463 = vld [vmem:[%s2] sm:$0xff]
          %v1464 = vld [vmem:[%s2 + $0x8] sm:$0xff]
          %v1465 = vld [vmem:[%s2 + $0x10] sm:$0xff]
          %v1466 = vld [vmem:[%s2 + $0x18] sm:$0xff]
          %v1467 = vld [vmem:[%s2 + $0x20] sm:$0xff]
          %v1468 = vld [vmem:[%s2 + $0x28] sm:$0xff]
          %v1469 = vld [vmem:[%s2 + $0x30] sm:$0xff]
          %v1470 = vld [vmem:[%s2 + $0x38] sm:$0xff]
          %v1471 = vld [vmem:[%s3] sm:$0x1]
          %v1473 = vlaneseq
          %v1474 = vshrl.u32 %v1473, 7
          %v1475 = vsub.s32 0, %v1474
          %v1476 = vrot.slane %v1471, %v1475
          %v1479 = vsel %vm1395, %v1431, 0
          %v1482 = vsel %vm1395, %v1432, 0
          %v1485 = vsel %vm1395, %v1433, 0
          %v1488 = vsel %vm1395, %v1434, 0
          %v1491 = vsel %vm1395, %v1435, 0
          %v1494 = vsel %vm1395, %v1436, 0
          %v1497 = vsel %vm1395, %v1437, 0
          %v1500 = vsel %vm1395, %v1438, 0
          %v1503 = vsel %vm1395, %v1439, 0
          %v1506 = vsel %vm1395, %v1440, 0
          %v1509 = vsel %vm1395, %v1441, 0
          %v1512 = vsel %vm1395, %v1442, 0
          %v1515 = vsel %vm1395, %v1443, 0
          %v1518 = vsel %vm1395, %v1444, 0
          %v1521 = vsel %vm1395, %v1445, 0
          %v1524 = vsel %vm1395, %v1446, 0
          %v1527 = vsel %vm1395, %v1447, 0
          %v1530 = vsel %vm1395, %v1448, 0
          %v1533 = vsel %vm1395, %v1449, 0
          %v1536 = vsel %vm1395, %v1450, 0
          %v1539 = vsel %vm1395, %v1451, 0
          %v1542 = vsel %vm1395, %v1452, 0
          %v1545 = vsel %vm1395, %v1453, 0
          %v1548 = vsel %vm1395, %v1454, 0
          %v1551 = vsel %vm1395, %v1455, 0
          %v1554 = vsel %vm1395, %v1456, 0
          %v1557 = vsel %vm1395, %v1457, 0
          %v1560 = vsel %vm1395, %v1458, 0
          %v1563 = vsel %vm1395, %v1459, 0
          %v1566 = vsel %vm1395, %v1460, 0
          %v1569 = vsel %vm1395, %v1461, 0
          %v1572 = vsel %vm1395, %v1462, 0
          %1574 = vmatprep.subr.mxu0 0.0
          %1575 = vmatpush1.msra.mxu0 %v1463
          %1576 = vmatprep.subr.mxu0 0.0
          %1577 = vmatpush1.msra.mxu0 %v1464
          %1578 = vmatprep.subr.mxu0 0.0
          %1579 = vmatpush1.msra.mxu0 %v1465
          %1580 = vmatprep.subr.mxu0 0.0
          %1581 = vmatpush1.msra.mxu0 %v1466
          %1582 = vmatprep.subr.mxu0 0.0
          %1583 = vmatpush1.msra.mxu0 %v1467
          %1584 = vmatprep.subr.mxu0 0.0
          %1585 = vmatpush1.msra.mxu0 %v1468
          %1586 = vmatprep.subr.mxu0 0.0
          %1587 = vmatpush1.msra.mxu0 %v1469
          %1588 = vmatprep.subr.mxu0 0.0
          %1589 = vmatpush1.msra.mxu0 %v1470
          %1590 = vmatprep.subr.mxu0 0.0
          %1591 = vmatpush1.msra.mxu0 0.0
          %1592 = vmatprep.subr.mxu0 0.0
          %1593 = vmatpush1.msra.mxu0 0.0
          %1594 = vmatprep.subr.mxu0 0.0
          %1595 = vmatpush1.msra.mxu0 0.0
          %1596 = vmatprep.subr.mxu0 0.0
          %1597 = vmatpush1.msra.mxu0 0.0
          %1598 = vmatprep.subr.mxu0 0.0
          %1599 = vmatpush1.msra.mxu0 0.0
          %1600 = vmatprep.subr.mxu0 0.0
          %1601 = vmatpush1.msra.mxu0 0.0
          %1602 = vmatprep.subr.mxu0 0.0
          %1603 = vmatpush1.msra.mxu0 0.0
          %1604 = vmatprep.subr.mxu0 0.0
          %1605 = vmatpush1.msra.mxu0 0.0
          %1606 = vmatprep.subr.mxu0 0.0
          %1607 = vmatpush1.msra.mxu0 0.0
          %1608 = vmatprep.subr.mxu0 0.0
          %1609 = vmatpush1.msra.mxu0 0.0
          %1610 = vmatprep.subr.mxu0 0.0
          %1611 = vmatpush1.msra.mxu0 0.0
          %1612 = vmatprep.subr.mxu0 0.0
          %1613 = vmatpush1.msra.mxu0 0.0
          %1614 = vmatprep.subr.mxu0 0.0
          %1615 = vmatpush1.msra.mxu0 0.0
          %1616 = vmatprep.subr.mxu0 0.0
          %1617 = vmatpush1.msra.mxu0 0.0
          %1618 = vmatprep.subr.mxu0 0.0
          %1619 = vmatpush1.msra.mxu0 0.0
          %1620 = vmatprep.subr.mxu0 0.0
          %1621 = vmatpush1.msra.mxu0 0.0
          %1622 = vmatprep.subr.mxu0 0.0
          %1623 = vmatpush1.msra.mxu0 0.0
          %1624 = vmatprep.subr.mxu0 0.0
          %1625 = vmatpush1.msra.mxu0 0.0
          %1626 = vmatprep.subr.mxu0 0.0
          %1627 = vmatpush1.msra.mxu0 0.0
          %1628 = vmatprep.subr.mxu0 0.0
          %1629 = vmatpush1.msra.mxu0 0.0
          %1630 = vmatprep.subr.mxu0 0.0
          %1631 = vmatpush1.msra.mxu0 0.0
          %1632 = vmatprep.subr.mxu0 0.0
          %1633 = vmatpush1.msra.mxu0 0.0
          %1634 = vmatprep.subr.mxu0 0.0
          %1635 = vmatpush1.msra.mxu0 0.0
          %1636 = vmatprep.subr.mxu0 0.0
          %1637 = vmatpush1.msra.mxu0 0.0
          %1638 = vmatprep.mubr.f32.mxu0 0.0
          %1639 = vmatmul.mubr.f32.gmra.mrb[0].mxu0 %v1479
          %v1640 = vpop.f32.mrb[0].mxu0
          %v1641 = vadd.f32 %v1476, %v1640
          %v1642 = vpop.f32.mrb[0].mxu0
          %1643 = vmatprep.mubr.f32.mxu0 0.0
          %1644 = vmatmul.mubr.f32.gmra.mrb[0].mxu0 %v1482
          %v1645 = vpop.f32.mrb[0].mxu0
          %v1646 = vadd.f32 %v1476, %v1645
          %v1647 = vpop.f32.mrb[0].mxu0
          %1648 = vmatprep.mubr.f32.mxu0 0.0
          %1649 = vmatmul.mubr.f32.gmra.mrb[0].mxu0 %v1485
          %v1650 = vpop.f32.mrb[0].mxu0
          %v1651 = vadd.f32 %v1476, %v1650
          %v1652 = vpop.f32.mrb[0].mxu0
          %1653 = vmatprep.mubr.f32.mxu0 0.0
          %1654 = vmatmul.mubr.f32.gmra.mrb[0].mxu0 %v1488
          %v1655 = vpop.f32.mrb[0].mxu0
          %v1656 = vadd.f32 %v1476, %v1655
          %v1657 = vpop.f32.mrb[0].mxu0
          %1658 = vmatprep.mubr.f32.mxu0 0.0
          %1659 = vmatmul.mubr.f32.gmra.mrb[0].mxu0 %v1491
          %v1660 = vpop.f32.mrb[0].mxu0
          %v1661 = vadd.f32 %v1476, %v1660
          %v1662 = vpop.f32.mrb[0].mxu0
          %1663 = vmatprep.mubr.f32.mxu0 0.0
          %1664 = vmatmul.mubr.f32.gmra.mrb[0].mxu0 %v1494
          %v1665 = vpop.f32.mrb[0].mxu0
          %v1666 = vadd.f32 %v1476, %v1665
          %v1667 = vpop.f32.mrb[0].mxu0
          %1668 = vmatprep.mubr.f32.mxu0 0.0
          %1669 = vmatmul.mubr.f32.gmra.mrb[0].mxu0 %v1497
          %v1670 = vpop.f32.mrb[0].mxu0
          %v1671 = vadd.f32 %v1476, %v1670
          %v1672 = vpop.f32.mrb[0].mxu0
          %1673 = vmatprep.mubr.f32.mxu0 0.0
          %1674 = vmatmul.mubr.f32.gmra.mrb[0].mxu0 %v1500
          %v1675 = vpop.f32.mrb[0].mxu0
          %v1676 = vadd.f32 %v1476, %v1675
          %v1677 = vpop.f32.mrb[0].mxu0
          %1678 = vmatprep.mubr.f32.mxu0 0.0
          %1679 = vmatmul.mubr.f32.gmra.mrb[0].mxu0 %v1503
          %v1680 = vpop.f32.mrb[0].mxu0
          %v1681 = vadd.f32 %v1476, %v1680
          %v1682 = vpop.f32.mrb[0].mxu0
          %1683 = vmatprep.mubr.f32.mxu0 0.0
          %1684 = vmatmul.mubr.f32.gmra.mrb[0].mxu0 %v1506
          %v1685 = vpop.f32.mrb[0].mxu0
          %v1686 = vadd.f32 %v1476, %v1685
          %v1687 = vpop.f32.mrb[0].mxu0
          %1688 = vmatprep.mubr.f32.mxu0 0.0
          %1689 = vmatmul.mubr.f32.gmra.mrb[0].mxu0 %v1509
          %v1690 = vpop.f32.mrb[0].mxu0
          %v1691 = vadd.f32 %v1476, %v1690
          %v1692 = vpop.f32.mrb[0].mxu0
          %1693 = vmatprep.mubr.f32.mxu0 0.0
          %1694 = vmatmul.mubr.f32.gmra.mrb[0].mxu0 %v1512
          %v1695 = vpop.f32.mrb[0].mxu0
          %v1696 = vadd.f32 %v1476, %v1695
          %v1697 = vpop.f32.mrb[0].mxu0
          %1698 = vmatprep.mubr.f32.mxu0 0.0
          %1699 = vmatmul.mubr.f32.gmra.mrb[0].mxu0 %v1515
          %v1700 = vpop.f32.mrb[0].mxu0
          %v1701 = vadd.f32 %v1476, %v1700
          %v1702 = vpop.f32.mrb[0].mxu0
          %1703 = vmatprep.mubr.f32.mxu0 0.0
          %1704 = vmatmul.mubr.f32.gmra.mrb[0].mxu0 %v1518
          %v1705 = vpop.f32.mrb[0].mxu0
          %v1706 = vadd.f32 %v1476, %v1705
          %v1707 = vpop.f32.mrb[0].mxu0
          %1708 = vmatprep.mubr.f32.mxu0 0.0
          %1709 = vmatmul.mubr.f32.gmra.mrb[0].mxu0 %v1521
          %v1710 = vpop.f32.mrb[0].mxu0
          %v1711 = vadd.f32 %v1476, %v1710
          %v1712 = vpop.f32.mrb[0].mxu0
          %1713 = vmatprep.mubr.f32.mxu0 0.0
          %1714 = vmatmul.mubr.f32.gmra.mrb[0].mxu0 %v1524
          %v1715 = vpop.f32.mrb[0].mxu0
          %v1716 = vadd.f32 %v1476, %v1715
          %v1717 = vpop.f32.mrb[0].mxu0
          %1718 = vmatprep.mubr.f32.mxu0 0.0
          %1719 = vmatmul.mubr.f32.gmra.mrb[0].mxu0 %v1527
          %v1720 = vpop.f32.mrb[0].mxu0
          %v1721 = vadd.f32 %v1476, %v1720
          %v1722 = vpop.f32.mrb[0].mxu0
          %1723 = vmatprep.mubr.f32.mxu0 0.0
          %1724 = vmatmul.mubr.f32.gmra.mrb[0].mxu0 %v1530
          %v1725 = vpop.f32.mrb[0].mxu0
          %v1726 = vadd.f32 %v1476, %v1725
          %v1727 = vpop.f32.mrb[0].mxu0
          %1728 = vmatprep.mubr.f32.mxu0 0.0
          %1729 = vmatmul.mubr.f32.gmra.mrb[0].mxu0 %v1533
          %v1730 = vpop.f32.mrb[0].mxu0
          %v1731 = vadd.f32 %v1476, %v1730
          %v1732 = vpop.f32.mrb[0].mxu0
          %1733 = vmatprep.mubr.f32.mxu0 0.0
          %1734 = vmatmul.mubr.f32.gmra.mrb[0].mxu0 %v1536
          %v1735 = vpop.f32.mrb[0].mxu0
          %v1736 = vadd.f32 %v1476, %v1735
          %v1737 = vpop.f32.mrb[0].mxu0
          %1738 = vmatprep.mubr.f32.mxu0 0.0
          %1739 = vmatmul.mubr.f32.gmra.mrb[0].mxu0 %v1539
          %v1740 = vpop.f32.mrb[0].mxu0
          %v1741 = vadd.f32 %v1476, %v1740
          %v1742 = vpop.f32.mrb[0].mxu0
          %1743 = vmatprep.mubr.f32.mxu0 0.0
          %1744 = vmatmul.mubr.f32.gmra.mrb[0].mxu0 %v1542
          %v1745 = vpop.f32.mrb[0].mxu0
          %v1746 = vadd.f32 %v1476, %v1745
          %v1747 = vpop.f32.mrb[0].mxu0
          %1748 = vmatprep.mubr.f32.mxu0 0.0
          %1749 = vmatmul.mubr.f32.gmra.mrb[0].mxu0 %v1545
          %v1750 = vpop.f32.mrb[0].mxu0
          %v1751 = vadd.f32 %v1476, %v1750
          %v1752 = vpop.f32.mrb[0].mxu0
          %1753 = vmatprep.mubr.f32.mxu0 0.0
          %1754 = vmatmul.mubr.f32.gmra.mrb[0].mxu0 %v1548
          %v1755 = vpop.f32.mrb[0].mxu0
          %v1756 = vadd.f32 %v1476, %v1755
          %v1757 = vpop.f32.mrb[0].mxu0
          %1758 = vmatprep.mubr.f32.mxu0 0.0
          %1759 = vmatmul.mubr.f32.gmra.mrb[0].mxu0 %v1551
          %v1760 = vpop.f32.mrb[0].mxu0
          %v1761 = vadd.f32 %v1476, %v1760
          %v1762 = vpop.f32.mrb[0].mxu0
          %1763 = vmatprep.mubr.f32.mxu0 0.0
          %1764 = vmatmul.mubr.f32.gmra.mrb[0].mxu0 %v1554
          %v1765 = vpop.f32.mrb[0].mxu0
          %v1766 = vadd.f32 %v1476, %v1765
          %v1767 = vpop.f32.mrb[0].mxu0
          %1768 = vmatprep.mubr.f32.mxu0 0.0
          %1769 = vmatmul.mubr.f32.gmra.mrb[0].mxu0 %v1557
          %v1770 = vpop.f32.mrb[0].mxu0
          %v1771 = vadd.f32 %v1476, %v1770
          %v1772 = vpop.f32.mrb[0].mxu0
          %1773 = vmatprep.mubr.f32.mxu0 0.0
          %1774 = vmatmul.mubr.f32.gmra.mrb[0].mxu0 %v1560
          %v1775 = vpop.f32.mrb[0].mxu0
          %v1776 = vadd.f32 %v1476, %v1775
          %v1777 = vpop.f32.mrb[0].mxu0
          %1778 = vmatprep.mubr.f32.mxu0 0.0
          %1779 = vmatmul.mubr.f32.gmra.mrb[0].mxu0 %v1563
          %v1780 = vpop.f32.mrb[0].mxu0
          %v1781 = vadd.f32 %v1476, %v1780
          %v1782 = vpop.f32.mrb[0].mxu0
          %1783 = vmatprep.mubr.f32.mxu0 0.0
          %1784 = vmatmul.mubr.f32.gmra.mrb[0].mxu0 %v1566
          %v1785 = vpop.f32.mrb[0].mxu0
          %v1786 = vadd.f32 %v1476, %v1785
          %v1787 = vpop.f32.mrb[0].mxu0
          %1788 = vmatprep.mubr.f32.mxu0 0.0
          %1789 = vmatmul.mubr.f32.gmra.mrb[0].mxu0 %v1569
          %v1790 = vpop.f32.mrb[0].mxu0
          %v1791 = vadd.f32 %v1476, %v1790
          %v1792 = vpop.f32.mrb[0].mxu0
          %1793 = vmatprep.mubr.f32.mxu0 0.0
          %1794 = vmatmul.mubr.f32.gmra.mrb[0].mxu0 %v1572
          %v1795 = vpop.f32.mrb[0].mxu0
          %v1796 = vadd.f32 %v1476, %v1795
          %v1797 = vpop.f32.mrb[0].mxu0
          %1798 = vdwg.mxu0
          %v1799 = vmax.f32 %v1641, 0.0
          %v1800 = vmax.f32 %v1646, 0.0
          %v1801 = vmax.f32 %v1651, 0.0
          %v1802 = vmax.f32 %v1656, 0.0
          %v1803 = vmax.f32 %v1661, 0.0
          %v1804 = vmax.f32 %v1666, 0.0
          %v1805 = vmax.f32 %v1671, 0.0
          %v1806 = vmax.f32 %v1676, 0.0
          %v1807 = vmax.f32 %v1681, 0.0
          %v1808 = vmax.f32 %v1686, 0.0
          %v1809 = vmax.f32 %v1691, 0.0
          %v1810 = vmax.f32 %v1696, 0.0
          %v1811 = vmax.f32 %v1701, 0.0
          %v1812 = vmax.f32 %v1706, 0.0
          %v1813 = vmax.f32 %v1711, 0.0
          %v1814 = vmax.f32 %v1716, 0.0
          %v1815 = vmax.f32 %v1721, 0.0
          %v1816 = vmax.f32 %v1726, 0.0
          %v1817 = vmax.f32 %v1731, 0.0
          %v1818 = vmax.f32 %v1736, 0.0
          %v1819 = vmax.f32 %v1741, 0.0
          %v1820 = vmax.f32 %v1746, 0.0
          %v1821 = vmax.f32 %v1751, 0.0
          %v1822 = vmax.f32 %v1756, 0.0
          %v1823 = vmax.f32 %v1761, 0.0
          %v1824 = vmax.f32 %v1766, 0.0
          %v1825 = vmax.f32 %v1771, 0.0
          %v1826 = vmax.f32 %v1776, 0.0
          %v1827 = vmax.f32 %v1781, 0.0
          %v1828 = vmax.f32 %v1786, 0.0
          %v1829 = vmax.f32 %v1791, 0.0
          %v1830 = vmax.f32 %v1796, 0.0
          %v1831 = vld [vmem:[%s4] sm:$0x1]
          %v1832 = vld [vmem:[%s328] sm:$0x3]
          %v1834 = vlaneseq
          %v1835 = vshrl.u32 %v1834, 7
          %v1836 = vsub.s32 0, %v1835
          %v1837 = vrot.slane %v1832, %v1836
          %v1838 = vlaneseq
          %v1839 = vshrl.u32 %v1838, 7
          %v1840 = vsub.s32 1, %v1839
          %v1841 = vrot.slane %v1832, %v1840
          %1844 = vmatprep.subr.mxu0 0.0
          %1845 = vmatpush1.xpose.msra.mxu0 %v1799
          %1846 = vmatprep.subr.mxu0 0.0
          %1847 = vmatpush1.xpose.msra.mxu0 %v1800
          %1848 = vmatprep.subr.mxu0 0.0
          %1849 = vmatpush1.xpose.msra.mxu0 %v1801
          %1850 = vmatprep.subr.mxu0 0.0
          %1851 = vmatpush1.xpose.msra.mxu0 %v1802
          %1852 = vmatprep.subr.mxu0 0.0
          %1853 = vmatpush1.xpose.msra.mxu0 %v1803
          %1854 = vmatprep.subr.mxu0 0.0
          %1855 = vmatpush1.xpose.msra.mxu0 %v1804
          %1856 = vmatprep.subr.mxu0 0.0
          %1857 = vmatpush1.xpose.msra.mxu0 %v1805
          %1858 = vmatprep.subr.mxu0 0.0
          %1859 = vmatpush1.xpose.msra.mxu0 %v1806
          %1860 = vmatprep.subr.mxu0 0.0
          %1861 = vmatpush1.xpose.msra.mxu0 %v1807
          %1862 = vmatprep.subr.mxu0 0.0
          %1863 = vmatpush1.xpose.msra.mxu0 %v1808
          %1864 = vmatprep.subr.mxu0 0.0
          %1865 = vmatpush1.xpose.msra.mxu0 %v1809
          %1866 = vmatprep.subr.mxu0 0.0
          %1867 = vmatpush1.xpose.msra.mxu0 %v1810
          %1868 = vmatprep.subr.mxu0 0.0
          %1869 = vmatpush1.xpose.msra.mxu0 %v1811
          %1870 = vmatprep.subr.mxu0 0.0
          %1871 = vmatpush1.xpose.msra.mxu0 %v1812
          %1872 = vmatprep.subr.mxu0 0.0
          %1873 = vmatpush1.xpose.msra.mxu0 %v1813
          %1874 = vmatprep.subr.mxu0 0.0
          %1875 = vmatpush1.xpose.msra.mxu0 %v1814
          %1876 = vmatprep.subr.mxu0 0.0
          %1877 = vmatpush1.xpose.msra.mxu0 %v1815
          %1878 = vmatprep.subr.mxu0 0.0
          %1879 = vmatpush1.xpose.msra.mxu0 %v1816
          %1880 = vmatprep.subr.mxu0 0.0
          %1881 = vmatpush1.xpose.msra.mxu0 %v1817
          %1882 = vmatprep.subr.mxu0 0.0
          %1883 = vmatpush1.xpose.msra.mxu0 %v1818
          %1884 = vmatprep.subr.mxu0 0.0
          %1885 = vmatpush1.xpose.msra.mxu0 %v1819
          %1886 = vmatprep.subr.mxu0 0.0
          %1887 = vmatpush1.xpose.msra.mxu0 %v1820
          %1888 = vmatprep.subr.mxu0 0.0
          %1889 = vmatpush1.xpose.msra.mxu0 %v1821
          %1890 = vmatprep.subr.mxu0 0.0
          %1891 = vmatpush1.xpose.msra.mxu0 %v1822
          %1892 = vmatprep.subr.mxu0 0.0
          %1893 = vmatpush1.xpose.msra.mxu0 %v1823
          %1894 = vmatprep.subr.mxu0 0.0
          %1895 = vmatpush1.xpose.msra.mxu0 %v1824
          %1896 = vmatprep.subr.mxu0 0.0
          %1897 = vmatpush1.xpose.msra.mxu0 %v1825
          %1898 = vmatprep.subr.mxu0 0.0
          %1899 = vmatpush1.xpose.msra.mxu0 %v1826
          %1900 = vmatprep.subr.mxu0 0.0
          %1901 = vmatpush1.xpose.msra.mxu0 %v1827
          %1902 = vmatprep.subr.mxu0 0.0
          %1903 = vmatpush1.xpose.msra.mxu0 %v1828
          %1904 = vmatprep.subr.mxu0 0.0
          %1905 = vmatpush1.xpose.msra.mxu0 %v1829
          %1906 = vmatprep.subr.mxu0 0.0
          %1907 = vmatpush1.xpose.msra.mxu0 %v1830
          %1908 = vmatprep.mubr.f32.mxu0 0.0
          %1909 = vmatmul.mubr.f32.gmra.mrb[0].mxu0 %v1831
          %v1910 = vpop.f32.mrb[0].mxu0
          %v1911 = vadd.f32 %v1837, %v1910
          %v1912 = vpop.f32.mrb[0].mxu0
          %v1913 = vadd.f32 %v1841, %v1912
          %1914 = vdwg.mxu0
          %v1917 = vcombine.low %v1911, %v1913
          %v1919 = vunpack.c.l.s4 1966171168
          %v1920 = vunpack.c.0.s8 %v1919
          %v1921 = vlaneseq
          %v1922 = vshrl.u32 %v1921, 7
          %v1923 = vsub.s32 %v1920, %v1922
          %v1924 = vrot.slane %v1917, %v1923
          %v1926 = vunpack.c.l.s4 1966171168
          %v1927 = vunpack.c.0.s8 %v1926
          %v1928 = vlaneseq
          %v1929 = vshrl.u32 %v1928, 7
          %v1930 = vsub.s32 %v1927, %v1929
          %v1931 = vrot.slane %v1924, %v1930
          %v1933 = vlaneseq
          %vm1934 = vcmp.ge.s32.totalorder %v1933, 0
          %vm1935 = vcmp.lt.s32.totalorder %v1933, 256
          %vm1936 = vmand %vm1934, %vm1935
          %1937 = vst.msk [vmem:[%s316] sm:$0x3] %vm1936, %v1931
        $region56: #{tpu_custom_call.1} parent=43 // pred_fallthru
          _
        %s1938 = sand.u32 %s186, 1
        %s1939 = scalar_lea.sflag [#allocation5], %s1938
        %s1940 = sand.u32 %s186, 1
        %s1941 = smul.addr %s1940, 2
        %s1942 = scalar_lea.vmem [#allocation6], %s1941
        // Predicated region
        $region57: #{tpu_custom_call.1} parent=43 // pred_check
          %p1943 = pneg %p196
        $region58: #{tpu_custom_call.1} parent=43 // pred_check_branch
          %1945 = sbr.rel (%p1943) target = $region60
        $region59: #{tpu_custom_call.1} parent=43 // pred_region
          %s1946 = smul.u32 2, %s27
          %s1948 = ssub.s32 32, 32
          %1949 = vsyncadd %s1939, %s1948
          %s1950 = smul.addr %s1946, 16
          %s1951 = scalar_lea.hbm %s6, %s1950
          %s1953 = sshll.u32 %s1942, 4
          %s1954 = int_to_ptr.vmem [resolvable:$true] %s1953
          %1956 = dma.vmem_to_hbm [thread:$0]  %s1954, 32, %s1951, %s1939
        $region60: #{tpu_custom_call.1} parent=43 // pred_fallthru
          _
      $region44: #{tpu_custom_call.1} parent=5 // pred_fallthru
        _
      %p1957 = scmp.le.s32.totalorder 2, %s18
      // Predicated region
      $region61: #{tpu_custom_call.1} parent=5 // pred_check
        %p1958 = pneg %p1957
      $region62: #{tpu_custom_call.1} parent=5 // pred_check_branch
        %1960 = sbr.rel (%p1958) target = $region64
      $region63: #{tpu_custom_call.1} parent=5 // pred_region
        %s1961 = ssub.s32 %s18, 2
        // Predicated region
        $region65: #{tpu_custom_call.1} parent=63 // pred_check
          %p1962 = pneg %p202
        $region66: #{tpu_custom_call.1} parent=63 // pred_check_branch
          %1964 = sbr.rel (%p1962) target = $region68
        $region67: #{tpu_custom_call.1} parent=63 // pred_region
          %s1965 = sand.u32 %s187, 1
          %s1966 = scalar_lea.sflag [#allocation5], %s1965
          %s1967 = sand.u32 %s187, 1
          %s1968 = smul.addr %s1967, 2
          %s1969 = scalar_lea.vmem [#allocation6], %s1968
          %1970 = dma.done %s1966, 32
        $region68: #{tpu_custom_call.1} parent=63 // pred_fallthru
          _
      $region64: #{tpu_custom_call.1} parent=5 // pred_fallthru
        _
    $region6: #{tpu_custom_call.1} parent=1 // loop_footer
      %s22 = sadd.s32 1, %s18
    $region7: #{tpu_custom_call.1} parent=1 // loop_footer_branch
      %17 = sbr.rel target = $region3
    $region8: #{tpu_custom_call.1} parent=1 // loop_exit
      _
    %1971 = vsyncpa [#allocation4], 1
    %s1972 = scalar_lea.sflag [#allocation4], 1
    %1973 = vsyncpa %s1972, 1
    %1974 = vsyncpa [#allocation5], 1
    %s1975 = scalar_lea.sflag [#allocation5], 1
    %1976 = vsyncpa %s1975, 1

</llo_original>
